<compile_context>
chip_gen: v5e
topology: v5e:2x2
jax: 0.10.0
libtpu: 0.0.40
codegen_flags: <defaults>
</compile_context>

<pallas_src>
import math
from functools import partial

import jax
import jax.numpy as jnp
from jax.experimental import pallas as pl
from jax.experimental.pallas import tpu as pltpu

LANE = 128


def _round_up(n, m):
    return ((n + m - 1) // m) * m


def _pad_to(arr, axis, multiple):
    size = arr.shape[axis]
    target = _round_up(size, multiple)
    if target == size:
        return arr
    widths = [(0, 0)] * arr.ndim
    widths[axis] = (0, target - size)
    return jnp.pad(arr, widths)


# ---------------------------------------------------------------------------
# Pallas kernel: (tile_m, K) @ (K, E) + (1, E) bias with a fused elementwise
# epilogue; bf16 operands, f32 accumulation, exactly one aligned store per step.
# ---------------------------------------------------------------------------
def _matmul_bias_kernel(x_ref, w_ref, b_ref, o_ref, *, epilogue):
    acc = jnp.dot(x_ref[...], w_ref[...], preferred_element_type=jnp.float32)
    acc = acc + b_ref[...].astype(jnp.float32)
    o_ref[...] = epilogue(acc).astype(o_ref.dtype)


def _tiled_matmul_bias(x, w, b, epilogue, tile_m):
    """x: (M, K), w: (K, E), b: (1, E).  M % tile_m == 0, E % 128 == 0 (K unconstrained:
    full-extent K blocks are used, compiler pads lanes in VMEM only)."""
    M, K = x.shape
    _, E = w.shape
    itemsize = jnp.dtype(x.dtype).itemsize
    # double-buffered activation + weight blocks (operand dtype) + double-buffered f32
    # output block + bias, plus slack; clamp into [16 MiB, 48 MiB] so it is valid on
    # v5e (16 MiB scoped default) and comfortably inside v7x's 64 MiB physical VMEM.
    need = 2 * (tile_m * K + K * E) * itemsize + 2 * (tile_m * E + E) * 4 + (2 << 20)
    vmem_limit = int(min(max(2 * need, 16 << 20), 48 << 20))
    return pl.pallas_call(
        partial(_matmul_bias_kernel, epilogue=epilogue),
        out_shape=jax.ShapeDtypeStruct((M, E), jnp.float32),
        grid_spec=pltpu.PrefetchScalarGridSpec(
            num_scalar_prefetch=0,
            grid=(M // tile_m,),
            in_specs=[
                pl.BlockSpec((tile_m, K), lambda i: (i, 0)),   # activations, tiled over M
                pl.BlockSpec((K, E), lambda i: (0, 0)),        # weight (grid-invariant)
                pl.BlockSpec((1, E), lambda i: (0, 0)),        # bias   (grid-invariant)
            ],
            out_specs=pl.BlockSpec((tile_m, E), lambda i: (i, 0)),
        ),
        compiler_params=pltpu.CompilerParams(
            dimension_semantics=("parallel",),
            vmem_limit_bytes=vmem_limit),
    )(x, w, b)


def _offset_mod_epilogue(acc, *, n_off, n_mod, max_off):
    # Columns [0, n_off): offsets -> clamp; [n_off, n_off+n_mod): modulator -> 2*sigmoid.
    col = jax.lax.broadcasted_iota(jnp.int32, acc.shape, 1)
    clamped = jnp.clip(acc, -max_off, max_off)
    # exp + reciprocal both land on the EUP slot (fully hidden under the MXU/DMA).
    sig = 2.0 * pl.reciprocal(1.0 + jnp.exp(-acc), approx=True)
    return jnp.where(col < n_off, clamped,
                     jnp.where(col < n_off + n_mod, sig, acc))


# ---------------------------------------------------------------------------
# XLA glue
# ---------------------------------------------------------------------------
def _im2col(x, ks, stride, padding):
    """x: [B, C, H, W] -> patches [B*Ho*Wo, C*ks*ks], flatten order (C, ki, kj)."""
    B, C, H, W = x.shape
    Ho = (H + 2 * padding - ks) // stride + 1
    Wo = (W + 2 * padding - ks) // stride + 1
    xp = jnp.pad(x, ((0, 0), (0, 0), (padding, padding), (padding, padding)))
    taps = []
    for ki in range(ks):
        for kj in range(ks):
            taps.append(xp[:, :, ki:ki + stride * Ho:stride, kj:kj + stride * Wo:stride])
    pat = jnp.stack(taps, axis=2)                 # [B, C, ks*ks, Ho, Wo]
    pat = jnp.transpose(pat, (0, 3, 4, 1, 2))     # [B, Ho, Wo, C, ks*ks]
    return pat.reshape(B * Ho * Wo, C * ks * ks), Ho, Wo


def deformable_conv2d_forward(x, offset_w, offset_b, mod_w, mod_b, reg_w, reg_b=None,
                              kernel_size=3, stride=1, padding=1, tile_m=512):
    """Forward of the PyTorch DeformableConv2d module (torchvision deform_conv2d semantics)."""
    B, C, H, W = x.shape
    ks = kernel_size
    KK = ks * ks
    Cout = reg_w.shape[0]
    max_off = max(H, W) / 4.0

    # ---- stage 1: offset + modulator 3x3 convs as one Pallas matmul (fused epilogue) ----
    patches, Ho, Wo = _im2col(x, ks, stride, padding)          # [M, C*KK], f32
    M = patches.shape[0]
    n_off, n_mod = 2 * KK, KK
    E1 = n_off + n_mod

    # tile_m clamped so padded-M waste stays bounded on small inputs; multiple of 128.
    tm = min(tile_m, _round_up(M, LANE))

    w_cat = jnp.concatenate([offset_w.reshape(n_off, C * KK),
                             mod_w.reshape(n_mod, C * KK)], axis=0).T      # [C*KK, 27]
    b_cat = jnp.concatenate([offset_b, mod_b]).reshape(1, E1)

    patches_p = _pad_to(patches, 0, tm).astype(jnp.bfloat16)   # K stays unpadded
    w_cat_p = _pad_to(w_cat, 1, LANE).astype(jnp.bfloat16)     # pad E only (lane-dense stores)
    b_cat_p = _pad_to(b_cat, 1, LANE).astype(jnp.float32)

    om = _tiled_matmul_bias(
        patches_p, w_cat_p, b_cat_p,
        partial(_offset_mod_epilogue, n_off=n_off, n_mod=n_mod, max_off=max_off),
        tile_m=tm)
    om = om[:M, :E1]
    offsets = om[:, :n_off].reshape(B, Ho * Wo, KK, 2)   # channel 2k = dy, 2k+1 = dx
    modulator = om[:, n_off:].reshape(B, Ho * Wo, KK)

    # ---- stage 2: bilinear sampling at the deformed locations (XLA gather) ----
    # TODO(synk): fold this gather + modulation into the stage-3 Pallas kernel (VMEM-resident x).
    kidx = jnp.arange(ks)
    base_y = jnp.arange(Ho)[:, None] * stride - padding + kidx[None, :]    # [Ho, ks]
    base_x = jnp.arange(Wo)[:, None] * stride - padding + kidx[None, :]    # [Wo, ks]
    base_py = jnp.broadcast_to(base_y[:, None, :, None], (Ho, Wo, ks, ks)).reshape(Ho * Wo, KK)
    base_px = jnp.broadcast_to(base_x[None, :, None, :], (Ho, Wo, ks, ks)).reshape(Ho * Wo, KK)
    py = base_py[None].astype(jnp.float32) + offsets[..., 0]               # [B, HoWo, KK]
    px = base_px[None].astype(jnp.float32) + offsets[..., 1]

    y0f = jnp.floor(py)
    x0f = jnp.floor(px)
    ly = py - y0f
    lx = px - x0f
    y0 = y0f.astype(jnp.int32)
    x0 = x0f.astype(jnp.int32)

    # channels-last gather so sampled columns land directly in matmul layout (KK, C)
    x_cl = jnp.transpose(x, (0, 2, 3, 1)).reshape(B, H * W, C)

    def corner(yi, xi, wy, wx):
        valid = ((yi >= 0) & (yi < H) & (xi >= 0) & (xi < W)).astype(x.dtype)
        idx = jnp.clip(yi, 0, H - 1) * W + jnp.clip(xi, 0, W - 1)          # [B, HoWo, KK]
        idx = idx.reshape(B, Ho * Wo * KK, 1)
        g = jnp.take_along_axis(x_cl, jnp.broadcast_to(idx, (B, Ho * Wo * KK, C)), axis=1)
        g = g.reshape(B, Ho * Wo, KK, C)
        return g * (wy * wx * valid)[..., None]

    sampled = (corner(y0, x0, 1.0 - ly, 1.0 - lx)
               + corner(y0, x0 + 1, 1.0 - ly, lx)
               + corner(y0 + 1, x0, ly, 1.0 - lx)
               + corner(y0 + 1, x0 + 1, ly, lx))                # [B, HoWo, KK, C]
    sampled = sampled * modulator[..., None]
    cols = sampled.reshape(M, KK * C)                           # no big transpose

    # ---- stage 3: main deformable-conv contraction (Pallas matmul) ----
    # weight re-ordered to (KK, C) inner layout to match cols (weight is tiny -> free).
    w_reg = jnp.transpose(reg_w.reshape(Cout, C, KK), (2, 1, 0)).reshape(KK * C, Cout)
    b_reg = (jnp.zeros((Cout,), jnp.float32) if reg_b is None else reg_b).reshape(1, Cout)

    cols_p = _pad_to(cols, 0, tm).astype(jnp.bfloat16)
    w_reg_p = _pad_to(w_reg, 1, LANE).astype(jnp.bfloat16)
    b_reg_p = _pad_to(b_reg, 1, LANE).astype(jnp.float32)

    out = _tiled_matmul_bias(cols_p, w_reg_p, b_reg_p, lambda a: a, tile_m=tm)
    out = out[:M, :Cout].reshape(B, Ho, Wo, Cout)
    return jnp.transpose(out, (0, 3, 1, 2))                                 # [B, Cout, Ho, Wo]


# ---------------------------------------------------------------------------
# Pure-JAX reference (independent path: lax.conv for the two convs, halo-padded
# bilinear sampling, einsum for the final contraction, Precision.HIGHEST).
# ---------------------------------------------------------------------------
def _reference(x, offset_w, offset_b, mod_w, mod_b, reg_w, reg_b, ks, stride, padding):
    B, C, H, W = x.shape
    max_off = max(H, W) / 4.0
    dn = jax.lax.conv_dimension_numbers(x.shape, offset_w.shape, ('NCHW', 'OIHW', 'NCHW'))

    def conv(inp, w):
        return jax.lax.conv_general_dilated(
            inp, w, (stride, stride), [(padding, padding)] * 2,
            dimension_numbers=dn, precision=jax.lax.Precision.HIGHEST)

    off = jnp.clip(conv(x, offset_w) + offset_b[None, :, None, None], -max_off, max_off)
    mod = 2.0 * jax.nn.sigmoid(conv(x, mod_w) + mod_b[None, :, None, None])
    Ho, Wo = off.shape[2], off.shape[3]
    KK = ks * ks

    halo = int(math.ceil(max_off)) + padding + ks + 1
    xp = jnp.pad(x, ((0, 0), (0, 0), (halo, halo), (halo, halo)))
    Hp, Wp = H + 2 * halo, W + 2 * halo
    xp_flat = xp.reshape(B, C, Hp * Wp)

    cols = []
    for k in range(KK):
        ki_, kj_ = k // ks, k % ks
        py = jnp.arange(Ho)[None, :, None] * stride - padding + ki_ + off[:, 2 * k] + halo
        px = jnp.arange(Wo)[None, None, :] * stride - padding + kj_ + off[:, 2 * k + 1] + halo
        y0 = jnp.floor(py).astype(jnp.int32)
        x0 = jnp.floor(px).astype(jnp.int32)
        ly = py - y0
        lx = px - x0

        def gat(yy, xx):
            idx = jnp.broadcast_to((yy * Wp + xx).reshape(B, 1, Ho * Wo), (B, C, Ho * Wo))
            return jnp.take_along_axis(xp_flat, idx, axis=2).reshape(B, C, Ho, Wo)

        samp = ((1 - ly)[:, None] * (1 - lx)[:, None] * gat(y0, x0)
                + (1 - ly)[:, None] * lx[:, None] * gat(y0, x0 + 1)
                + ly[:, None] * (1 - lx)[:, None] * gat(y0 + 1, x0)
                + ly[:, None] * lx[:, None] * gat(y0 + 1, x0 + 1))
        cols.append(samp * mod[:, k][:, None])

    colsarr = jnp.stack(cols, axis=2)                         # [B, C, KK, Ho, Wo]
    wmat = reg_w.reshape(reg_w.shape[0], C, KK)
    out = jnp.einsum('ock,bckhw->bohw', wmat, colsarr, precision=jax.lax.Precision.HIGHEST)
    if reg_b is not None:
        out = out + reg_b[None, :, None, None]
    return out


if __name__ == "__main__":
    B, C, H, W = 2, 4, 16, 16
    ks, stride, pad = 3, 1, 1
    Cout = 32
    KK = ks * ks

    key = jax.random.PRNGKey(0)
    kx, k1, k2, k3, k4, k5 = jax.random.split(key, 6)
    x = jax.random.normal(kx, (B, C, H, W), dtype=jnp.float32)
    # NOTE: the PyTorch module zero-inits offset/modulator convs; small random weights are
    # used here so the deformable (bilinear-sampling) path is actually exercised.
    offset_w = jax.random.normal(k1, (2 * KK, C, ks, ks), dtype=jnp.float32) * 0.1
    offset_b = jax.random.normal(k2, (2 * KK,), dtype=jnp.float32) * 0.1
    mod_w = jax.random.normal(k3, (KK, C, ks, ks), dtype=jnp.float32) * 0.1
    mod_b = jax.random.normal(k4, (KK,), dtype=jnp.float32) * 0.1
    reg_w = jax.random.normal(k5, (Cout, C, ks, ks), dtype=jnp.float32) * 0.1
    reg_b = None   # module default: regular_conv bias=False

    fwd = jax.jit(deformable_conv2d_forward,
                  static_argnames=("kernel_size", "stride", "padding", "tile_m"))
    out = fwd(x, offset_w, offset_b, mod_w, mod_b, reg_w, reg_b,
              kernel_size=ks, stride=stride, padding=pad)
    out = jax.block_until_ready(out)

    ref = _reference(x, offset_w, offset_b, mod_w, mod_b, reg_w, reg_b, ks, stride, pad)
    assert out.shape == (B, Cout, H, W), out.shape
    max_err = float(jnp.max(jnp.abs(out - ref)))
    # Tolerance documents the bf16 MXU operand streaming (f32 accumulation) and the
    # approx-EUP reciprocal in the sigmoid epilogue vs the Precision.HIGHEST f32 reference.
    assert jnp.allclose(out, ref, atol=3e-2, rtol=3e-2), f"mismatch vs reference, max_err={max_err}"
    print("KERNEL_OK")
</pallas_src>

<mosaic_0001>
module attributes {stable_mosaic.version = 11 : i64} {
  func.func @_matmul_bias_kernel(%arg0: i32, %arg1: memref<512x36xbf16, #tpu.memory_space<vmem>>, %arg2: memref<36x128xbf16, #tpu.memory_space<vmem>>, %arg3: memref<1x128xf32, #tpu.memory_space<vmem>>, %arg4: memref<512x128xf32, #tpu.memory_space<vmem>>) attributes {dimension_semantics = [#tpu.dimension_semantics<parallel>], iteration_bounds = array<i64: 1>, scalar_prefetch = 0 : i64, scratch_operands = 0 : i64, tpu.core_type = #tpu.core_type<tc>, window_params = [{transform_indices = @transform_0, window_bounds = array<i64: 512, 36>}, {pipeline_mode = #tpu.pipeline_mode<synchronous>, transform_indices = @transform_1, window_bounds = array<i64: 36, 128>}, {pipeline_mode = #tpu.pipeline_mode<synchronous>, transform_indices = @transform_2, window_bounds = array<i64: 1, 128>}, {transform_indices = @transform_3, window_bounds = array<i64: 512, 128>}]} {
    %c0 = arith.constant 0 : index
    %c0_0 = arith.constant 0 : index
    %0 = vector.load %arg1[%c0, %c0_0] : memref<512x36xbf16, #tpu.memory_space<vmem>>, vector<512x36xbf16>
    %c0_1 = arith.constant 0 : index
    %c0_2 = arith.constant 0 : index
    %1 = vector.load %arg2[%c0_1, %c0_2] : memref<36x128xbf16, #tpu.memory_space<vmem>>, vector<36x128xbf16>
    %cst = arith.constant dense<0.000000e+00> : vector<512x128xf32>
    %2 = tpu.matmul %0, %1, %cst {dimension_numbers = #tpu.dot_dimension_numbers<[1], [0], [0], [1], [0, 0, 1, 1], [], []>} : vector<512x36xbf16>, vector<36x128xbf16>, vector<512x128xf32> -> vector<512x128xf32>
    %c0_3 = arith.constant 0 : index
    %c0_4 = arith.constant 0 : index
    %3 = vector.load %arg3[%c0_3, %c0_4] : memref<1x128xf32, #tpu.memory_space<vmem>>, vector<1x128xf32>
    %4 = vector.broadcast %3 : vector<1x128xf32> to vector<512x128xf32>
    %5 = arith.addf %2, %4 : vector<512x128xf32>
    %6 = tpu.iota {dimensions = array<i32: 1>} : vector<512x128xi32>
    %cst_5 = arith.constant -4.000000e+00 : f32
    %cst_6 = arith.constant 4.000000e+00 : f32
    %7 = vector.broadcast %cst_5 : f32 to vector<512x128xf32>
    %8 = arith.maximumf %7, %5 : vector<512x128xf32>
    %9 = vector.broadcast %cst_6 : f32 to vector<512x128xf32>
    %10 = arith.minimumf %9, %8 : vector<512x128xf32>
    %cst_7 = arith.constant 0.000000e+00 : f32
    %11 = vector.broadcast %cst_7 : f32 to vector<512x128xf32>
    %12 = arith.subf %11, %5 : vector<512x128xf32>
    %13 = math.exp %12 : vector<512x128xf32>
    %cst_8 = arith.constant 1.000000e+00 : f32
    %14 = vector.broadcast %cst_8 : f32 to vector<512x128xf32>
    %15 = arith.addf %14, %13 : vector<512x128xf32>
    %16 = tpu.reciprocal %15 {approx = true} : vector<512x128xf32> -> vector<512x128xf32>
    %cst_9 = arith.constant 2.000000e+00 : f32
    %17 = vector.broadcast %cst_9 : f32 to vector<512x128xf32>
    %18 = arith.mulf %17, %16 : vector<512x128xf32>
    %c18_i32 = arith.constant 18 : i32
    %19 = vector.broadcast %c18_i32 : i32 to vector<512x128xi32>
    %20 = arith.cmpi slt, %6, %19 : vector<512x128xi32>
    %c27_i32 = arith.constant 27 : i32
    %21 = vector.broadcast %c27_i32 : i32 to vector<512x128xi32>
    %22 = arith.cmpi slt, %6, %21 : vector<512x128xi32>
    %23 = arith.select %22, %18, %5 : vector<512x128xi1>, vector<512x128xf32>
    %24 = arith.select %20, %10, %23 : vector<512x128xi1>, vector<512x128xf32>
    %c0_10 = arith.constant 0 : index
    %c0_11 = arith.constant 0 : index
    %25 = vector.load %arg4[%c0_10, %c0_11] : memref<512x128xf32, #tpu.memory_space<vmem>>, vector<512x128xf32>
    tpu.vector_store %arg4[%c0_10, %c0_11], %24 {strides = array<i32>} : memref<512x128xf32, #tpu.memory_space<vmem>>, vector<512x128xf32>,
    return
  }
  func.func @transform_0(%arg0: i32) -> (i32, i32) {
    %c0_i32 = arith.constant 0 : i32
    %c0_i32_0 = arith.constant 0 : i32
    return %arg0, %c0_i32 : i32, i32
  }
  func.func @transform_1(%arg0: i32) -> (i32, i32) {
    %c0_i32 = arith.constant 0 : i32
    %c0_i32_0 = arith.constant 0 : i32
    %c0_i32_1 = arith.constant 0 : i32
    return %c0_i32, %c0_i32_0 : i32, i32
  }
  func.func @transform_2(%arg0: i32) -> (i32, i32) {
    %c0_i32 = arith.constant 0 : i32
    %c0_i32_0 = arith.constant 0 : i32
    %c0_i32_1 = arith.constant 0 : i32
    return %c0_i32, %c0_i32_0 : i32, i32
  }
  func.func @transform_3(%arg0: i32) -> (i32, i32) {
    %c0_i32 = arith.constant 0 : i32
    %c0_i32_0 = arith.constant 0 : i32
    return %arg0, %c0_i32 : i32, i32
  }
}

module attributes {stable_mosaic.version = 11 : i64} {
  func.func @_matmul_bias_kernel(%arg0: i32, %arg1: memref<512x36xbf16, #tpu.memory_space<vmem>>, %arg2: memref<36x128xbf16, #tpu.memory_space<vmem>>, %arg3: memref<1x128xf32, #tpu.memory_space<vmem>>, %arg4: memref<512x128xf32, #tpu.memory_space<vmem>>) attributes {dimension_semantics = [#tpu.dimension_semantics<parallel>], iteration_bounds = array<i64: 1>, scalar_prefetch = 0 : i64, scratch_operands = 0 : i64, tpu.core_type = #tpu.core_type<tc>, window_params = [{transform_indices = @transform_0, window_bounds = array<i64: 512, 36>}, {pipeline_mode = #tpu.pipeline_mode<synchronous>, transform_indices = @transform_1, window_bounds = array<i64: 36, 128>}, {pipeline_mode = #tpu.pipeline_mode<synchronous>, transform_indices = @transform_2, window_bounds = array<i64: 1, 128>}, {transform_indices = @transform_3, window_bounds = array<i64: 512, 128>}]} {
    %c0 = arith.constant 0 : index
    %c0_0 = arith.constant 0 : index
    %0 = vector.load %arg1[%c0, %c0_0] : memref<512x36xbf16, #tpu.memory_space<vmem>>, vector<512x36xbf16>
    %c0_1 = arith.constant 0 : index
    %c0_2 = arith.constant 0 : index
    %1 = vector.load %arg2[%c0_1, %c0_2] : memref<36x128xbf16, #tpu.memory_space<vmem>>, vector<36x128xbf16>
    %cst = arith.constant dense<0.000000e+00> : vector<512x128xf32>
    %2 = tpu.matmul %0, %1, %cst {dimension_numbers = #tpu.dot_dimension_numbers<[1], [0], [0], [1], [0, 0, 1, 1], [], []>} : vector<512x36xbf16>, vector<36x128xbf16>, vector<512x128xf32> -> vector<512x128xf32>
    %c0_3 = arith.constant 0 : index
    %c0_4 = arith.constant 0 : index
    %3 = vector.load %arg3[%c0_3, %c0_4] : memref<1x128xf32, #tpu.memory_space<vmem>>, vector<1x128xf32>
    %4 = vector.broadcast %3 : vector<1x128xf32> to vector<512x128xf32>
    %5 = arith.addf %2, %4 : vector<512x128xf32>
    %c0_5 = arith.constant 0 : index
    %c0_6 = arith.constant 0 : index
    %6 = vector.load %arg4[%c0_5, %c0_6] : memref<512x128xf32, #tpu.memory_space<vmem>>, vector<512x128xf32>
    tpu.vector_store %arg4[%c0_5, %c0_6], %5 {strides = array<i32>} : memref<512x128xf32, #tpu.memory_space<vmem>>, vector<512x128xf32>,
    return
  }
  func.func @transform_0(%arg0: i32) -> (i32, i32) {
    %c0_i32 = arith.constant 0 : i32
    %c0_i32_0 = arith.constant 0 : i32
    return %arg0, %c0_i32 : i32, i32
  }
  func.func @transform_1(%arg0: i32) -> (i32, i32) {
    %c0_i32 = arith.constant 0 : i32
    %c0_i32_0 = arith.constant 0 : i32
    %c0_i32_1 = arith.constant 0 : i32
    return %c0_i32, %c0_i32_0 : i32, i32
  }
  func.func @transform_2(%arg0: i32) -> (i32, i32) {
    %c0_i32 = arith.constant 0 : i32
    %c0_i32_0 = arith.constant 0 : i32
    %c0_i32_1 = arith.constant 0 : i32
    return %c0_i32, %c0_i32_0 : i32, i32
  }
  func.func @transform_3(%arg0: i32) -> (i32, i32) {
    %c0_i32 = arith.constant 0 : i32
    %c0_i32_0 = arith.constant 0 : i32
    return %arg0, %c0_i32 : i32, i32
  }
}

</mosaic_0001>

<llo_original>
// kernel: deformable_conv2d_forward.2
$region0: #{deformable_conv2d_forward.2}
  #allocation0 [shape = 'u32[]', space=smem, size = 0x4, offset = 0x4, fixed_abs, tag = 'smem constant byte address 0x4 - core index']
  #allocation1 [shape = 'u32[72,128]{1,0:T(1,128)}', space=vmem, size = 0x9000, scoped, tag = 'internal scratch']
  %s0 = inlined_call_operand.vmem [shape: bf16[512,36], index: 0, kind: input, shape index: {}]
  %s1 = inlined_call_operand.vmem [shape: bf16[36,128], index: 1, kind: input, shape index: {}]
  %s2 = inlined_call_operand.vmem [shape: f32[1,128], index: 2, kind: input, shape index: {}]
  %s3 = inlined_call_operand.vmem [shape: f32[512,128], index: 3, kind: output, shape index: {}]
  %s4 = sld [smem:[#allocation0]]
  $region22: #{deformable_conv2d_forward.2} parent=0
    _
  %s6 = ssub.s32 1, %s4
  %s7 = scalar_select 0, %s6, %s4
  // Predicated region
  $region2: #{deformable_conv2d_forward.2} parent=0 // pred_check
    _
  $region3: #{deformable_conv2d_forward.2} parent=0 // pred_check_branch
    %9 = sbr.rel (0) target = $region5
  $region4: #{deformable_conv2d_forward.2} parent=0 // pred_region
    _
  $region5: #{deformable_conv2d_forward.2} parent=0 // pred_fallthru
    _
  // Predicated region
  $region6: #{deformable_conv2d_forward.2} parent=0 // pred_check
    _
  $region7: #{deformable_conv2d_forward.2} parent=0 // pred_check_branch
    %11 = sbr.rel (0) target = $region9
  $region8: #{deformable_conv2d_forward.2} parent=0 // pred_region
    _
  $region9: #{deformable_conv2d_forward.2} parent=0 // pred_fallthru
    _
  // Predicated region
  $region10: #{deformable_conv2d_forward.2} parent=0 // pred_check
    _
  $region11: #{deformable_conv2d_forward.2} parent=0 // pred_check_branch
    %13 = sbr.rel (0) target = $region13
  $region12: #{deformable_conv2d_forward.2} parent=0 // pred_region
    _
  $region13: #{deformable_conv2d_forward.2} parent=0 // pred_fallthru
    _
  %v15 = vld [vmem:[%s0] sm:$0xf]
  %v16 = vld [vmem:[%s0 + $0x4] sm:$0xf]
  %v17 = vld [vmem:[%s0 + $0x8] sm:$0xf]
  %v18 = vld [vmem:[%s0 + $0xc] sm:$0xf]
  %v19 = vld [vmem:[%s0 + $0x10] sm:$0xf]
  %v20 = vld [vmem:[%s0 + $0x14] sm:$0xf]
  %v21 = vld [vmem:[%s0 + $0x18] sm:$0xf]
  %v22 = vld [vmem:[%s0 + $0x1c] sm:$0xf]
  %v23 = vld [vmem:[%s0 + $0x20] sm:$0xf]
  %v24 = vld [vmem:[%s0 + $0x24] sm:$0xf]
  %v25 = vld [vmem:[%s0 + $0x28] sm:$0xf]
  %v26 = vld [vmem:[%s0 + $0x2c] sm:$0xf]
  %v27 = vld [vmem:[%s0 + $0x30] sm:$0xf]
  %v28 = vld [vmem:[%s0 + $0x34] sm:$0xf]
  %v29 = vld [vmem:[%s0 + $0x38] sm:$0xf]
  %v30 = vld [vmem:[%s0 + $0x3c] sm:$0xf]
  %v31 = vld [vmem:[%s0 + $0x40] sm:$0xf]
  %v32 = vld [vmem:[%s0 + $0x44] sm:$0xf]
  %v33 = vld [vmem:[%s0 + $0x48] sm:$0xf]
  %v34 = vld [vmem:[%s0 + $0x4c] sm:$0xf]
  %v35 = vld [vmem:[%s0 + $0x50] sm:$0xf]
  %v36 = vld [vmem:[%s0 + $0x54] sm:$0xf]
  %v37 = vld [vmem:[%s0 + $0x58] sm:$0xf]
  %v38 = vld [vmem:[%s0 + $0x5c] sm:$0xf]
  %v39 = vld [vmem:[%s0 + $0x60] sm:$0xf]
  %v40 = vld [vmem:[%s0 + $0x64] sm:$0xf]
  %v41 = vld [vmem:[%s0 + $0x68] sm:$0xf]
  %v42 = vld [vmem:[%s0 + $0x6c] sm:$0xf]
  %v43 = vld [vmem:[%s0 + $0x70] sm:$0xf]
  %v44 = vld [vmem:[%s0 + $0x74] sm:$0xf]
  %v45 = vld [vmem:[%s0 + $0x78] sm:$0xf]
  %v46 = vld [vmem:[%s0 + $0x7c] sm:$0xf]
  %v47 = vld [vmem:[%s0 + $0x80] sm:$0xf]
  %v48 = vld [vmem:[%s0 + $0x84] sm:$0xf]
  %v49 = vld [vmem:[%s0 + $0x88] sm:$0xf]
  %v50 = vld [vmem:[%s0 + $0x8c] sm:$0xf]
  %v51 = vld [vmem:[%s0 + $0x90] sm:$0xf]
  %v52 = vld [vmem:[%s0 + $0x94] sm:$0xf]
  %v53 = vld [vmem:[%s0 + $0x98] sm:$0xf]
  %v54 = vld [vmem:[%s0 + $0x9c] sm:$0xf]
  %v55 = vld [vmem:[%s0 + $0xa0] sm:$0xf]
  %v56 = vld [vmem:[%s0 + $0xa4] sm:$0xf]
  %v57 = vld [vmem:[%s0 + $0xa8] sm:$0xf]
  %v58 = vld [vmem:[%s0 + $0xac] sm:$0xf]
  %v59 = vld [vmem:[%s0 + $0xb0] sm:$0xf]
  %v60 = vld [vmem:[%s0 + $0xb4] sm:$0xf]
  %v61 = vld [vmem:[%s0 + $0xb8] sm:$0xf]
  %v62 = vld [vmem:[%s0 + $0xbc] sm:$0xf]
  %v63 = vld [vmem:[%s0 + $0xc0] sm:$0xf]
  %v64 = vld [vmem:[%s0 + $0xc4] sm:$0xf]
  %v65 = vld [vmem:[%s0 + $0xc8] sm:$0xf]
  %v66 = vld [vmem:[%s0 + $0xcc] sm:$0xf]
  %v67 = vld [vmem:[%s0 + $0xd0] sm:$0xf]
  %v68 = vld [vmem:[%s0 + $0xd4] sm:$0xf]
  %v69 = vld [vmem:[%s0 + $0xd8] sm:$0xf]
  %v70 = vld [vmem:[%s0 + $0xdc] sm:$0xf]
  %v71 = vld [vmem:[%s0 + $0xe0] sm:$0xf]
  %v72 = vld [vmem:[%s0 + $0xe4] sm:$0xf]
  %v73 = vld [vmem:[%s0 + $0xe8] sm:$0xf]
  %v74 = vld [vmem:[%s0 + $0xec] sm:$0xf]
  %v75 = vld [vmem:[%s0 + $0xf0] sm:$0xf]
  %v76 = vld [vmem:[%s0 + $0xf4] sm:$0xf]
  %v77 = vld [vmem:[%s0 + $0xf8] sm:$0xf]
  %v78 = vld [vmem:[%s0 + $0xfc] sm:$0xf]
  %v79 = vld [vmem:[%s1] sm:$0xf]
  %v80 = vld [vmem:[%s1 + $0x4] sm:$0xf]
  %v81 = vld [vmem:[%s1 + $0x8] sm:$0xf]
  %v82 = vld [vmem:[%s1 + $0xc] sm:$0xf]
  %v83 = vld [vmem:[%s1 + $0x10] sm:$0x3]
  %v84 = vld [vmem:[%s2] sm:$0x1]
  %v86 = vperm.slane %v84, 0
  %v152 = vunpack.c.l.b16 %v15
  %v153 = vunpack.c.l.b16 %v16
  %v154 = vunpack.c.l.b16 %v17
  %v155 = vunpack.c.l.b16 %v18
  %v156 = vunpack.c.l.b16 %v19
  %v157 = vunpack.c.l.b16 %v20
  %v158 = vunpack.c.l.b16 %v21
  %v159 = vunpack.c.l.b16 %v22
  %v160 = vunpack.c.l.b16 %v23
  %v161 = vunpack.c.l.b16 %v24
  %v162 = vunpack.c.l.b16 %v25
  %v163 = vunpack.c.l.b16 %v26
  %v164 = vunpack.c.l.b16 %v27
  %v165 = vunpack.c.l.b16 %v28
  %v166 = vunpack.c.l.b16 %v29
  %v167 = vunpack.c.l.b16 %v30
  %v168 = vunpack.c.l.b16 %v31
  %v169 = vunpack.c.l.b16 %v32
  %v170 = vunpack.c.l.b16 %v33
  %v171 = vunpack.c.l.b16 %v34
  %v172 = vunpack.c.l.b16 %v35
  %v173 = vunpack.c.l.b16 %v36
  %v174 = vunpack.c.l.b16 %v37
  %v175 = vunpack.c.l.b16 %v38
  %v176 = vunpack.c.l.b16 %v39
  %v177 = vunpack.c.l.b16 %v40
  %v178 = vunpack.c.l.b16 %v41
  %v179 = vunpack.c.l.b16 %v42
  %v180 = vunpack.c.l.b16 %v43
  %v181 = vunpack.c.l.b16 %v44
  %v182 = vunpack.c.l.b16 %v45
  %v183 = vunpack.c.l.b16 %v46
  %v184 = vunpack.c.l.b16 %v47
  %v185 = vunpack.c.l.b16 %v48
  %v186 = vunpack.c.l.b16 %v49
  %v187 = vunpack.c.l.b16 %v50
  %v188 = vunpack.c.l.b16 %v51
  %v189 = vunpack.c.l.b16 %v52
  %v190 = vunpack.c.l.b16 %v53
  %v191 = vunpack.c.l.b16 %v54
  %v192 = vunpack.c.l.b16 %v55
  %v193 = vunpack.c.l.b16 %v56
  %v194 = vunpack.c.l.b16 %v57
  %v195 = vunpack.c.l.b16 %v58
  %v196 = vunpack.c.l.b16 %v59
  %v197 = vunpack.c.l.b16 %v60
  %v198 = vunpack.c.l.b16 %v61
  %v199 = vunpack.c.l.b16 %v62
  %v200 = vunpack.c.l.b16 %v63
  %v201 = vunpack.c.l.b16 %v64
  %v202 = vunpack.c.l.b16 %v65
  %v203 = vunpack.c.l.b16 %v66
  %v204 = vunpack.c.l.b16 %v67
  %v205 = vunpack.c.l.b16 %v68
  %v206 = vunpack.c.l.b16 %v69
  %v207 = vunpack.c.l.b16 %v70
  %v208 = vunpack.c.l.b16 %v71
  %v209 = vunpack.c.l.b16 %v72
  %v210 = vunpack.c.l.b16 %v73
  %v211 = vunpack.c.l.b16 %v74
  %v212 = vunpack.c.l.b16 %v75
  %v213 = vunpack.c.l.b16 %v76
  %v214 = vunpack.c.l.b16 %v77
  %v215 = vunpack.c.l.b16 %v78
  %v216 = vpack.c.b16 %v153, %v152
  %v217 = vpack.c.b16 %v155, %v154
  %v218 = vpack.c.b16 %v157, %v156
  %v219 = vpack.c.b16 %v159, %v158
  %v220 = vpack.c.b16 %v161, %v160
  %v221 = vpack.c.b16 %v163, %v162
  %v222 = vpack.c.b16 %v165, %v164
  %v223 = vpack.c.b16 %v167, %v166
  %v224 = vpack.c.b16 %v169, %v168
  %v225 = vpack.c.b16 %v171, %v170
  %v226 = vpack.c.b16 %v173, %v172
  %v227 = vpack.c.b16 %v175, %v174
  %v228 = vpack.c.b16 %v177, %v176
  %v229 = vpack.c.b16 %v179, %v178
  %v230 = vpack.c.b16 %v181, %v180
  %v231 = vpack.c.b16 %v183, %v182
  %v232 = vpack.c.b16 %v185, %v184
  %v233 = vpack.c.b16 %v187, %v186
  %v234 = vpack.c.b16 %v189, %v188
  %v235 = vpack.c.b16 %v191, %v190
  %v236 = vpack.c.b16 %v193, %v192
  %v237 = vpack.c.b16 %v195, %v194
  %v238 = vpack.c.b16 %v197, %v196
  %v239 = vpack.c.b16 %v199, %v198
  %v240 = vpack.c.b16 %v201, %v200
  %v241 = vpack.c.b16 %v203, %v202
  %v242 = vpack.c.b16 %v205, %v204
  %v243 = vpack.c.b16 %v207, %v206
  %v244 = vpack.c.b16 %v209, %v208
  %v245 = vpack.c.b16 %v211, %v210
  %v246 = vpack.c.b16 %v213, %v212
  %v247 = vpack.c.b16 %v215, %v214
  %v253 = vunpack.c.l.b16 %v79
  %v254 = vunpack.c.l.b16 %v80
  %v255 = vunpack.c.l.b16 %v81
  %v256 = vunpack.c.l.b16 %v82
  %v257 = vunpack.c.l.b16 %v83
  %v258 = vpack.c.b16 %v254, %v253
  %v259 = vpack.c.b16 %v256, %v255
  %v260 = vpack.c.b16 %v257, %v257
  %vm263 = vcmask 293888
  %v265 = vsel %vm263, %v216, 0
  %v268 = vsel %vm263, %v217, 0
  %v271 = vsel %vm263, %v218, 0
  %v274 = vsel %vm263, %v219, 0
  %v277 = vsel %vm263, %v220, 0
  %v280 = vsel %vm263, %v221, 0
  %v283 = vsel %vm263, %v222, 0
  %v286 = vsel %vm263, %v223, 0
  %v289 = vsel %vm263, %v224, 0
  %v292 = vsel %vm263, %v225, 0
  %v295 = vsel %vm263, %v226, 0
  %v298 = vsel %vm263, %v227, 0
  %v301 = vsel %vm263, %v228, 0
  %v304 = vsel %vm263, %v229, 0
  %v307 = vsel %vm263, %v230, 0
  %v310 = vsel %vm263, %v231, 0
  %v313 = vsel %vm263, %v232, 0
  %v316 = vsel %vm263, %v233, 0
  %v319 = vsel %vm263, %v234, 0
  %v322 = vsel %vm263, %v235, 0
  %v325 = vsel %vm263, %v236, 0
  %v328 = vsel %vm263, %v237, 0
  %v331 = vsel %vm263, %v238, 0
  %v334 = vsel %vm263, %v239, 0
  %v337 = vsel %vm263, %v240, 0
  %v340 = vsel %vm263, %v241, 0
  %v343 = vsel %vm263, %v242, 0
  %v346 = vsel %vm263, %v243, 0
  %v349 = vsel %vm263, %v244, 0
  %v352 = vsel %vm263, %v245, 0
  %v355 = vsel %vm263, %v246, 0
  %v358 = vsel %vm263, %v247, 0
  %vm360 = vcmask 1041408
  %v362 = vsel %vm360, %v260, 0
  %364 = vmatpush.bf16.msra.mxu0 0
  %365 = vmatpush.bf16.msra.mxu0 0
  %366 = vmatpush.bf16.msra.mxu0 0
  %367 = vmatpush.bf16.msra.mxu0 0
  %368 = vmatpush.bf16.msra.mxu0 0
  %369 = vmatpush.bf16.msra.mxu0 %v362
  %370 = vmatpush.bf16.msra.mxu0 %v259
  %371 = vmatpush.bf16.msra.mxu0 %v258
  %372 = vmatmul.bf16.gmra.mxu0 %v265
  %v373 = vpop.f32.mrf.mxu0
  %v374 = vadd.f32 %v86, %v373
  %v375 = vpop.f32.mrf.mxu0
  %v376 = vadd.f32 %v86, %v375
  %377 = vmatmul.bf16.gmra.mxu0 %v268
  %v378 = vpop.f32.mrf.mxu0
  %v379 = vadd.f32 %v86, %v378
  %v380 = vpop.f32.mrf.mxu0
  %v381 = vadd.f32 %v86, %v380
  %382 = vmatmul.bf16.gmra.mxu0 %v271
  %v383 = vpop.f32.mrf.mxu0
  %v384 = vadd.f32 %v86, %v383
  %v385 = vpop.f32.mrf.mxu0
  %v386 = vadd.f32 %v86, %v385
  %387 = vmatmul.bf16.gmra.mxu0 %v274
  %v388 = vpop.f32.mrf.mxu0
  %v389 = vadd.f32 %v86, %v388
  %v390 = vpop.f32.mrf.mxu0
  %v391 = vadd.f32 %v86, %v390
  %392 = vmatmul.bf16.gmra.mxu0 %v277
  %v393 = vpop.f32.mrf.mxu0
  %v394 = vadd.f32 %v86, %v393
  %v395 = vpop.f32.mrf.mxu0
  %v396 = vadd.f32 %v86, %v395
  %397 = vmatmul.bf16.gmra.mxu0 %v280
  %v398 = vpop.f32.mrf.mxu0
  %v399 = vadd.f32 %v86, %v398
  %v400 = vpop.f32.mrf.mxu0
  %v401 = vadd.f32 %v86, %v400
  %402 = vmatmul.bf16.gmra.mxu0 %v283
  %v403 = vpop.f32.mrf.mxu0
  %v404 = vadd.f32 %v86, %v403
  %v405 = vpop.f32.mrf.mxu0
  %v406 = vadd.f32 %v86, %v405
  %407 = vmatmul.bf16.gmra.mxu0 %v286
  %v408 = vpop.f32.mrf.mxu0
  %v409 = vadd.f32 %v86, %v408
  %v410 = vpop.f32.mrf.mxu0
  %v411 = vadd.f32 %v86, %v410
  %412 = vmatmul.bf16.gmra.mxu0 %v289
  %v413 = vpop.f32.mrf.mxu0
  %v414 = vadd.f32 %v86, %v413
  %v415 = vpop.f32.mrf.mxu0
  %v416 = vadd.f32 %v86, %v415
  %417 = vmatmul.bf16.gmra.mxu0 %v292
  %v418 = vpop.f32.mrf.mxu0
  %v419 = vadd.f32 %v86, %v418
  %v420 = vpop.f32.mrf.mxu0
  %v421 = vadd.f32 %v86, %v420
  %422 = vmatmul.bf16.gmra.mxu0 %v295
  %v423 = vpop.f32.mrf.mxu0
  %v424 = vadd.f32 %v86, %v423
  %v425 = vpop.f32.mrf.mxu0
  %v426 = vadd.f32 %v86, %v425
  %427 = vmatmul.bf16.gmra.mxu0 %v298
  %v428 = vpop.f32.mrf.mxu0
  %v429 = vadd.f32 %v86, %v428
  %v430 = vpop.f32.mrf.mxu0
  %v431 = vadd.f32 %v86, %v430
  %432 = vmatmul.bf16.gmra.mxu0 %v301
  %v433 = vpop.f32.mrf.mxu0
  %v434 = vadd.f32 %v86, %v433
  %v435 = vpop.f32.mrf.mxu0
  %v436 = vadd.f32 %v86, %v435
  %437 = vmatmul.bf16.gmra.mxu0 %v304
  %v438 = vpop.f32.mrf.mxu0
  %v439 = vadd.f32 %v86, %v438
  %v440 = vpop.f32.mrf.mxu0
  %v441 = vadd.f32 %v86, %v440
  %442 = vmatmul.bf16.gmra.mxu0 %v307
  %v443 = vpop.f32.mrf.mxu0
  %v444 = vadd.f32 %v86, %v443
  %v445 = vpop.f32.mrf.mxu0
  %v446 = vadd.f32 %v86, %v445
  %447 = vmatmul.bf16.gmra.mxu0 %v310
  %v448 = vpop.f32.mrf.mxu0
  %v449 = vadd.f32 %v86, %v448
  %v450 = vpop.f32.mrf.mxu0
  %v451 = vadd.f32 %v86, %v450
  %452 = vmatmul.bf16.gmra.mxu0 %v313
  %v453 = vpop.f32.mrf.mxu0
  %v454 = vadd.f32 %v86, %v453
  %v455 = vpop.f32.mrf.mxu0
  %v456 = vadd.f32 %v86, %v455
  %457 = vmatmul.bf16.gmra.mxu0 %v316
  %v458 = vpop.f32.mrf.mxu0
  %v459 = vadd.f32 %v86, %v458
  %v460 = vpop.f32.mrf.mxu0
  %v461 = vadd.f32 %v86, %v460
  %462 = vmatmul.bf16.gmra.mxu0 %v319
  %v463 = vpop.f32.mrf.mxu0
  %v464 = vadd.f32 %v86, %v463
  %v465 = vpop.f32.mrf.mxu0
  %v466 = vadd.f32 %v86, %v465
  %467 = vmatmul.bf16.gmra.mxu0 %v322
  %v468 = vpop.f32.mrf.mxu0
  %v469 = vadd.f32 %v86, %v468
  %v470 = vpop.f32.mrf.mxu0
  %v471 = vadd.f32 %v86, %v470
  %472 = vmatmul.bf16.gmra.mxu0 %v325
  %v473 = vpop.f32.mrf.mxu0
  %v474 = vadd.f32 %v86, %v473
  %v475 = vpop.f32.mrf.mxu0
  %v476 = vadd.f32 %v86, %v475
  %477 = vmatmul.bf16.gmra.mxu0 %v328
  %v478 = vpop.f32.mrf.mxu0
  %v479 = vadd.f32 %v86, %v478
  %v480 = vpop.f32.mrf.mxu0
  %v481 = vadd.f32 %v86, %v480
  %482 = vmatmul.bf16.gmra.mxu0 %v331
  %v483 = vpop.f32.mrf.mxu0
  %v484 = vadd.f32 %v86, %v483
  %v485 = vpop.f32.mrf.mxu0
  %v486 = vadd.f32 %v86, %v485
  %487 = vmatmul.bf16.gmra.mxu0 %v334
  %v488 = vpop.f32.mrf.mxu0
  %v489 = vadd.f32 %v86, %v488
  %v490 = vpop.f32.mrf.mxu0
  %v491 = vadd.f32 %v86, %v490
  %492 = vmatmul.bf16.gmra.mxu0 %v337
  %v493 = vpop.f32.mrf.mxu0
  %v494 = vadd.f32 %v86, %v493
  %v495 = vpop.f32.mrf.mxu0
  %v496 = vadd.f32 %v86, %v495
  %497 = vmatmul.bf16.gmra.mxu0 %v340
  %v498 = vpop.f32.mrf.mxu0
  %v499 = vadd.f32 %v86, %v498
  %v500 = vpop.f32.mrf.mxu0
  %v501 = vadd.f32 %v86, %v500
  %502 = vmatmul.bf16.gmra.mxu0 %v343
  %v503 = vpop.f32.mrf.mxu0
  %v504 = vadd.f32 %v86, %v503
  %v505 = vpop.f32.mrf.mxu0
  %v506 = vadd.f32 %v86, %v505
  %507 = vmatmul.bf16.gmra.mxu0 %v346
  %v508 = vpop.f32.mrf.mxu0
  %v509 = vadd.f32 %v86, %v508
  %v510 = vpop.f32.mrf.mxu0
  %v511 = vadd.f32 %v86, %v510
  %512 = vmatmul.bf16.gmra.mxu0 %v349
  %v513 = vpop.f32.mrf.mxu0
  %v514 = vadd.f32 %v86, %v513
  %v515 = vpop.f32.mrf.mxu0
  %v516 = vadd.f32 %v86, %v515
  %517 = vmatmul.bf16.gmra.mxu0 %v352
  %v518 = vpop.f32.mrf.mxu0
  %v519 = vadd.f32 %v86, %v518
  %v520 = vpop.f32.mrf.mxu0
  %v521 = vadd.f32 %v86, %v520
  %522 = vmatmul.bf16.gmra.mxu0 %v355
  %v523 = vpop.f32.mrf.mxu0
  %v524 = vadd.f32 %v86, %v523
  %v525 = vpop.f32.mrf.mxu0
  %v526 = vadd.f32 %v86, %v525
  %527 = vmatmul.bf16.gmra.mxu0 %v358
  %v528 = vpop.f32.mrf.mxu0
  %v529 = vadd.f32 %v86, %v528
  %v530 = vpop.f32.mrf.mxu0
  %v531 = vadd.f32 %v86, %v530
  %532 = vdwg.mxu0
  %v533 = vlaneseq
  %v534 = vand.u32 %v533, 127
  %v535 = vmax.f32 %v374, -4.0
  %v536 = vmax.f32 %v376, -4.0
  %v537 = vmax.f32 %v379, -4.0
  %v538 = vmax.f32 %v381, -4.0
  %v539 = vmax.f32 %v384, -4.0
  %v540 = vmax.f32 %v386, -4.0
  %v541 = vmax.f32 %v389, -4.0
  %v542 = vmax.f32 %v391, -4.0
  %v543 = vmax.f32 %v394, -4.0
  %v544 = vmax.f32 %v396, -4.0
  %v545 = vmax.f32 %v399, -4.0
  %v546 = vmax.f32 %v401, -4.0
  %v547 = vmax.f32 %v404, -4.0
  %v548 = vmax.f32 %v406, -4.0
  %v549 = vmax.f32 %v409, -4.0
  %v550 = vmax.f32 %v411, -4.0
  %v551 = vmax.f32 %v414, -4.0
  %v552 = vmax.f32 %v416, -4.0
  %v553 = vmax.f32 %v419, -4.0
  %v554 = vmax.f32 %v421, -4.0
  %v555 = vmax.f32 %v424, -4.0
  %v556 = vmax.f32 %v426, -4.0
  %v557 = vmax.f32 %v429, -4.0
  %v558 = vmax.f32 %v431, -4.0
  %v559 = vmax.f32 %v434, -4.0
  %v560 = vmax.f32 %v436, -4.0
  %v561 = vmax.f32 %v439, -4.0
  %v562 = vmax.f32 %v441, -4.0
  %v563 = vmax.f32 %v444, -4.0
  %v564 = vmax.f32 %v446, -4.0
  %v565 = vmax.f32 %v449, -4.0
  %v566 = vmax.f32 %v451, -4.0
  %v567 = vmax.f32 %v454, -4.0
  %v568 = vmax.f32 %v456, -4.0
  %v569 = vmax.f32 %v459, -4.0
  %v570 = vmax.f32 %v461, -4.0
  %v571 = vmax.f32 %v464, -4.0
  %v572 = vmax.f32 %v466, -4.0
  %v573 = vmax.f32 %v469, -4.0
  %v574 = vmax.f32 %v471, -4.0
  %v575 = vmax.f32 %v474, -4.0
  %v576 = vmax.f32 %v476, -4.0
  %v577 = vmax.f32 %v479, -4.0
  %v578 = vmax.f32 %v481, -4.0
  %v579 = vmax.f32 %v484, -4.0
  %v580 = vmax.f32 %v486, -4.0
  %v581 = vmax.f32 %v489, -4.0
  %v582 = vmax.f32 %v491, -4.0
  %v583 = vmax.f32 %v494, -4.0
  %v584 = vmax.f32 %v496, -4.0
  %v585 = vmax.f32 %v499, -4.0
  %v586 = vmax.f32 %v501, -4.0
  %v587 = vmax.f32 %v504, -4.0
  %v588 = vmax.f32 %v506, -4.0
  %v589 = vmax.f32 %v509, -4.0
  %v590 = vmax.f32 %v511, -4.0
  %v591 = vmax.f32 %v514, -4.0
  %v592 = vmax.f32 %v516, -4.0
  %v593 = vmax.f32 %v519, -4.0
  %v594 = vmax.f32 %v521, -4.0
  %v595 = vmax.f32 %v524, -4.0
  %v596 = vmax.f32 %v526, -4.0
  %v597 = vmax.f32 %v529, -4.0
  %v598 = vmax.f32 %v531, -4.0
  %v599 = vmin.f32 %v535, 4.0
  %v600 = vmin.f32 %v536, 4.0
  %v601 = vmin.f32 %v537, 4.0
  %v602 = vmin.f32 %v538, 4.0
  %v603 = vmin.f32 %v539, 4.0
  %v604 = vmin.f32 %v540, 4.0
  %v605 = vmin.f32 %v541, 4.0
  %v606 = vmin.f32 %v542, 4.0
  %v607 = vmin.f32 %v543, 4.0
  %v608 = vmin.f32 %v544, 4.0
  %v609 = vmin.f32 %v545, 4.0
  %v610 = vmin.f32 %v546, 4.0
  %v611 = vmin.f32 %v547, 4.0
  %v612 = vmin.f32 %v548, 4.0
  %v613 = vmin.f32 %v549, 4.0
  %v614 = vmin.f32 %v550, 4.0
  %v615 = vmin.f32 %v551, 4.0
  %v616 = vmin.f32 %v552, 4.0
  %v617 = vmin.f32 %v553, 4.0
  %v618 = vmin.f32 %v554, 4.0
  %v619 = vmin.f32 %v555, 4.0
  %v620 = vmin.f32 %v556, 4.0
  %v621 = vmin.f32 %v557, 4.0
  %v622 = vmin.f32 %v558, 4.0
  %v623 = vmin.f32 %v559, 4.0
  %v624 = vmin.f32 %v560, 4.0
  %v625 = vmin.f32 %v561, 4.0
  %v626 = vmin.f32 %v562, 4.0
  %v627 = vmin.f32 %v563, 4.0
  %v628 = vmin.f32 %v564, 4.0
  %v629 = vmin.f32 %v565, 4.0
  %v630 = vmin.f32 %v566, 4.0
  %v631 = vmin.f32 %v567, 4.0
  %v632 = vmin.f32 %v568, 4.0
  %v633 = vmin.f32 %v569, 4.0
  %v634 = vmin.f32 %v570, 4.0
  %v635 = vmin.f32 %v571, 4.0
  %v636 = vmin.f32 %v572, 4.0
  %v637 = vmin.f32 %v573, 4.0
  %v638 = vmin.f32 %v574, 4.0
  %v639 = vmin.f32 %v575, 4.0
  %v640 = vmin.f32 %v576, 4.0
  %v641 = vmin.f32 %v577, 4.0
  %v642 = vmin.f32 %v578, 4.0
  %v643 = vmin.f32 %v579, 4.0
  %v644 = vmin.f32 %v580, 4.0
  %v645 = vmin.f32 %v581, 4.0
  %v646 = vmin.f32 %v582, 4.0
  %v647 = vmin.f32 %v583, 4.0
  %v648 = vmin.f32 %v584, 4.0
  %v649 = vmin.f32 %v585, 4.0
  %v650 = vmin.f32 %v586, 4.0
  %v651 = vmin.f32 %v587, 4.0
  %v652 = vmin.f32 %v588, 4.0
  %v653 = vmin.f32 %v589, 4.0
  %v654 = vmin.f32 %v590, 4.0
  %v655 = vmin.f32 %v591, 4.0
  %v656 = vmin.f32 %v592, 4.0
  %v657 = vmin.f32 %v593, 4.0
  %v658 = vmin.f32 %v594, 4.0
  %v659 = vmin.f32 %v595, 4.0
  %v660 = vmin.f32 %v596, 4.0
  %v661 = vmin.f32 %v597, 4.0
  %v662 = vmin.f32 %v598, 4.0
  %v663 = vsub.f32 0.0, %v374
  %v664 = vsub.f32 0.0, %v376
  %v665 = vsub.f32 0.0, %v379
  %v666 = vsub.f32 0.0, %v381
  %v667 = vsub.f32 0.0, %v384
  %v668 = vsub.f32 0.0, %v386
  %v669 = vsub.f32 0.0, %v389
  %v670 = vsub.f32 0.0, %v391
  %v671 = vsub.f32 0.0, %v394
  %v672 = vsub.f32 0.0, %v396
  %v673 = vsub.f32 0.0, %v399
  %v674 = vsub.f32 0.0, %v401
  %v675 = vsub.f32 0.0, %v404
  %v676 = vsub.f32 0.0, %v406
  %v677 = vsub.f32 0.0, %v409
  %v678 = vsub.f32 0.0, %v411
  %v679 = vsub.f32 0.0, %v414
  %v680 = vsub.f32 0.0, %v416
  %v681 = vsub.f32 0.0, %v419
  %v682 = vsub.f32 0.0, %v421
  %v683 = vsub.f32 0.0, %v424
  %v684 = vsub.f32 0.0, %v426
  %v685 = vsub.f32 0.0, %v429
  %v686 = vsub.f32 0.0, %v431
  %v687 = vsub.f32 0.0, %v434
  %v688 = vsub.f32 0.0, %v436
  %v689 = vsub.f32 0.0, %v439
  %v690 = vsub.f32 0.0, %v441
  %v691 = vsub.f32 0.0, %v444
  %v692 = vsub.f32 0.0, %v446
  %v693 = vsub.f32 0.0, %v449
  %v694 = vsub.f32 0.0, %v451
  %v695 = vsub.f32 0.0, %v454
  %v696 = vsub.f32 0.0, %v456
  %v697 = vsub.f32 0.0, %v459
  %v698 = vsub.f32 0.0, %v461
  %v699 = vsub.f32 0.0, %v464
  %v700 = vsub.f32 0.0, %v466
  %v701 = vsub.f32 0.0, %v469
  %v702 = vsub.f32 0.0, %v471
  %v703 = vsub.f32 0.0, %v474
  %v704 = vsub.f32 0.0, %v476
  %v705 = vsub.f32 0.0, %v479
  %v706 = vsub.f32 0.0, %v481
  %v707 = vsub.f32 0.0, %v484
  %v708 = vsub.f32 0.0, %v486
  %v709 = vsub.f32 0.0, %v489
  %v710 = vsub.f32 0.0, %v491
  %v711 = vsub.f32 0.0, %v494
  %v712 = vsub.f32 0.0, %v496
  %v713 = vsub.f32 0.0, %v499
  %v714 = vsub.f32 0.0, %v501
  %v715 = vsub.f32 0.0, %v504
  %v716 = vsub.f32 0.0, %v506
  %v717 = vsub.f32 0.0, %v509
  %v718 = vsub.f32 0.0, %v511
  %v719 = vsub.f32 0.0, %v514
  %v720 = vsub.f32 0.0, %v516
  %v721 = vsub.f32 0.0, %v519
  %v722 = vsub.f32 0.0, %v521
  %v723 = vsub.f32 0.0, %v524
  %v724 = vsub.f32 0.0, %v526
  %v725 = vsub.f32 0.0, %v529
  %v726 = vsub.f32 0.0, %v531
  %v727 = vmul.f32 %v663, 1.442695
  %v728 = vpow.pop %v727
  %v729 = vmul.f32 %v664, 1.442695
  %v730 = vpow.pop %v729
  %v731 = vmul.f32 %v665, 1.442695
  %v732 = vpow.pop %v731
  %v733 = vmul.f32 %v666, 1.442695
  %v734 = vpow.pop %v733
  %v735 = vmul.f32 %v667, 1.442695
  %v736 = vpow.pop %v735
  %v737 = vmul.f32 %v668, 1.442695
  %v738 = vpow.pop %v737
  %v739 = vmul.f32 %v669, 1.442695
  %v740 = vpow.pop %v739
  %v741 = vmul.f32 %v670, 1.442695
  %v742 = vpow.pop %v741
  %v743 = vmul.f32 %v671, 1.442695
  %v744 = vpow.pop %v743
  %v745 = vmul.f32 %v672, 1.442695
  %v746 = vpow.pop %v745
  %v747 = vmul.f32 %v673, 1.442695
  %v748 = vpow.pop %v747
  %v749 = vmul.f32 %v674, 1.442695
  %v750 = vpow.pop %v749
  %v751 = vmul.f32 %v675, 1.442695
  %v752 = vpow.pop %v751
  %v753 = vmul.f32 %v676, 1.442695
  %v754 = vpow.pop %v753
  %v755 = vmul.f32 %v677, 1.442695
  %v756 = vpow.pop %v755
  %v757 = vmul.f32 %v678, 1.442695
  %v758 = vpow.pop %v757
  %v759 = vmul.f32 %v679, 1.442695
  %v760 = vpow.pop %v759
  %v761 = vmul.f32 %v680, 1.442695
  %v762 = vpow.pop %v761
  %v763 = vmul.f32 %v681, 1.442695
  %v764 = vpow.pop %v763
  %v765 = vmul.f32 %v682, 1.442695
  %v766 = vpow.pop %v765
  %v767 = vmul.f32 %v683, 1.442695
  %v768 = vpow.pop %v767
  %v769 = vmul.f32 %v684, 1.442695
  %v770 = vpow.pop %v769
  %v771 = vmul.f32 %v685, 1.442695
  %v772 = vpow.pop %v771
  %v773 = vmul.f32 %v686, 1.442695
  %v774 = vpow.pop %v773
  %v775 = vmul.f32 %v687, 1.442695
  %v776 = vpow.pop %v775
  %v777 = vmul.f32 %v688, 1.442695
  %v778 = vpow.pop %v777
  %v779 = vmul.f32 %v689, 1.442695
  %v780 = vpow.pop %v779
  %v781 = vmul.f32 %v690, 1.442695
  %v782 = vpow.pop %v781
  %v783 = vmul.f32 %v691, 1.442695
  %v784 = vpow.pop %v783
  %v785 = vmul.f32 %v692, 1.442695
  %v786 = vpow.pop %v785
  %v787 = vmul.f32 %v693, 1.442695
  %v788 = vpow.pop %v787
  %v789 = vmul.f32 %v694, 1.442695
  %v790 = vpow.pop %v789
  %v791 = vmul.f32 %v695, 1.442695
  %v792 = vpow.pop %v791
  %v793 = vmul.f32 %v696, 1.442695
  %v794 = vpow.pop %v793
  %v795 = vmul.f32 %v697, 1.442695
  %v796 = vpow.pop %v795
  %v797 = vmul.f32 %v698, 1.442695
  %v798 = vpow.pop %v797
  %v799 = vmul.f32 %v699, 1.442695
  %v800 = vpow.pop %v799
  %v801 = vmul.f32 %v700, 1.442695
  %v802 = vpow.pop %v801
  %v803 = vmul.f32 %v701, 1.442695
  %v804 = vpow.pop %v803
  %v805 = vmul.f32 %v702, 1.442695
  %v806 = vpow.pop %v805
  %v807 = vmul.f32 %v703, 1.442695
  %v808 = vpow.pop %v807
  %v809 = vmul.f32 %v704, 1.442695
  %v810 = vpow.pop %v809
  %v811 = vmul.f32 %v705, 1.442695
  %v812 = vpow.pop %v811
  %v813 = vmul.f32 %v706, 1.442695
  %v814 = vpow.pop %v813
  %v815 = vmul.f32 %v707, 1.442695
  %v816 = vpow.pop %v815
  %v817 = vmul.f32 %v708, 1.442695
  %v818 = vpow.pop %v817
  %v819 = vmul.f32 %v709, 1.442695
  %v820 = vpow.pop %v819
  %v821 = vmul.f32 %v710, 1.442695
  %v822 = vpow.pop %v821
  %v823 = vmul.f32 %v711, 1.442695
  %v824 = vpow.pop %v823
  %v825 = vmul.f32 %v712, 1.442695
  %v826 = vpow.pop %v825
  %v827 = vmul.f32 %v713, 1.442695
  %v828 = vpow.pop %v827
  %v829 = vmul.f32 %v714, 1.442695
  %v830 = vpow.pop %v829
  %v831 = vmul.f32 %v715, 1.442695
  %v832 = vpow.pop %v831
  %v833 = vmul.f32 %v716, 1.442695
  %v834 = vpow.pop %v833
  %v835 = vmul.f32 %v717, 1.442695
  %v836 = vpow.pop %v835
  %v837 = vmul.f32 %v718, 1.442695
  %v838 = vpow.pop %v837
  %v839 = vmul.f32 %v719, 1.442695
  %v840 = vpow.pop %v839
  %v841 = vmul.f32 %v720, 1.442695
  %v842 = vpow.pop %v841
  %v843 = vmul.f32 %v721, 1.442695
  %v844 = vpow.pop %v843
  %v845 = vmul.f32 %v722, 1.442695
  %v846 = vpow.pop %v845
  %v847 = vmul.f32 %v723, 1.442695
  %v848 = vpow.pop %v847
  %v849 = vmul.f32 %v724, 1.442695
  %v850 = vpow.pop %v849
  %v851 = vmul.f32 %v725, 1.442695
  %v852 = vpow.pop %v851
  %v853 = vmul.f32 %v726, 1.442695
  %v854 = vpow.pop %v853
  %v855 = vadd.f32 %v728, 1.0
  %v856 = vadd.f32 %v730, 1.0
  %v857 = vadd.f32 %v732, 1.0
  %v858 = vadd.f32 %v734, 1.0
  %v859 = vadd.f32 %v736, 1.0
  %v860 = vadd.f32 %v738, 1.0
  %v861 = vadd.f32 %v740, 1.0
  %v862 = vadd.f32 %v742, 1.0
  %v863 = vadd.f32 %v744, 1.0
  %v864 = vadd.f32 %v746, 1.0
  %v865 = vadd.f32 %v748, 1.0
  %v866 = vadd.f32 %v750, 1.0
  %v867 = vadd.f32 %v752, 1.0
  %v868 = vadd.f32 %v754, 1.0
  %v869 = vadd.f32 %v756, 1.0
  %v870 = vadd.f32 %v758, 1.0
  %v871 = vadd.f32 %v760, 1.0
  %v872 = vadd.f32 %v762, 1.0
  %v873 = vadd.f32 %v764, 1.0
  %v874 = vadd.f32 %v766, 1.0
  %v875 = vadd.f32 %v768, 1.0
  %v876 = vadd.f32 %v770, 1.0
  %v877 = vadd.f32 %v772, 1.0
  %v878 = vadd.f32 %v774, 1.0
  %v879 = vadd.f32 %v776, 1.0
  %v880 = vadd.f32 %v778, 1.0
  %v881 = vadd.f32 %v780, 1.0
  %v882 = vadd.f32 %v782, 1.0
  %v883 = vadd.f32 %v784, 1.0
  %v884 = vadd.f32 %v786, 1.0
  %v885 = vadd.f32 %v788, 1.0
  %v886 = vadd.f32 %v790, 1.0
  %v887 = vadd.f32 %v792, 1.0
  %v888 = vadd.f32 %v794, 1.0
  %v889 = vadd.f32 %v796, 1.0
  %v890 = vadd.f32 %v798, 1.0
  %v891 = vadd.f32 %v800, 1.0
  %v892 = vadd.f32 %v802, 1.0
  %v893 = vadd.f32 %v804, 1.0
  %v894 = vadd.f32 %v806, 1.0
  %v895 = vadd.f32 %v808, 1.0
  %v896 = vadd.f32 %v810, 1.0
  %v897 = vadd.f32 %v812, 1.0
  %v898 = vadd.f32 %v814, 1.0
  %v899 = vadd.f32 %v816, 1.0
  %v900 = vadd.f32 %v818, 1.0
  %v901 = vadd.f32 %v820, 1.0
  %v902 = vadd.f32 %v822, 1.0
  %v903 = vadd.f32 %v824, 1.0
  %v904 = vadd.f32 %v826, 1.0
  %v905 = vadd.f32 %v828, 1.0
  %v906 = vadd.f32 %v830, 1.0
  %v907 = vadd.f32 %v832, 1.0
  %v908 = vadd.f32 %v834, 1.0
  %v909 = vadd.f32 %v836, 1.0
  %v910 = vadd.f32 %v838, 1.0
  %v911 = vadd.f32 %v840, 1.0
  %v912 = vadd.f32 %v842, 1.0
  %v913 = vadd.f32 %v844, 1.0
  %v914 = vadd.f32 %v846, 1.0
  %v915 = vadd.f32 %v848, 1.0
  %v916 = vadd.f32 %v850, 1.0
  %v917 = vadd.f32 %v852, 1.0
  %v918 = vadd.f32 %v854, 1.0
  %v919 = vrcp.pop %v855
  %v920 = vrcp.pop %v856
  %v921 = vrcp.pop %v857
  %v922 = vrcp.pop %v858
  %v923 = vrcp.pop %v859
  %v924 = vrcp.pop %v860
  %v925 = vrcp.pop %v861
  %v926 = vrcp.pop %v862
  %v927 = vrcp.pop %v863
  %v928 = vrcp.pop %v864
  %v929 = vrcp.pop %v865
  %v930 = vrcp.pop %v866
  %v931 = vrcp.pop %v867
  %v932 = vrcp.pop %v868
  %v933 = vrcp.pop %v869
  %v934 = vrcp.pop %v870
  %v935 = vrcp.pop %v871
  %v936 = vrcp.pop %v872
  %v937 = vrcp.pop %v873
  %v938 = vrcp.pop %v874
  %v939 = vrcp.pop %v875
  %v940 = vrcp.pop %v876
  %v941 = vrcp.pop %v877
  %v942 = vrcp.pop %v878
  %v943 = vrcp.pop %v879
  %v944 = vrcp.pop %v880
  %v945 = vrcp.pop %v881
  %v946 = vrcp.pop %v882
  %v947 = vrcp.pop %v883
  %v948 = vrcp.pop %v884
  %v949 = vrcp.pop %v885
  %v950 = vrcp.pop %v886
  %v951 = vrcp.pop %v887
  %v952 = vrcp.pop %v888
  %v953 = vrcp.pop %v889
  %v954 = vrcp.pop %v890
  %v955 = vrcp.pop %v891
  %v956 = vrcp.pop %v892
  %v957 = vrcp.pop %v893
  %v958 = vrcp.pop %v894
  %v959 = vrcp.pop %v895
  %v960 = vrcp.pop %v896
  %v961 = vrcp.pop %v897
  %v962 = vrcp.pop %v898
  %v963 = vrcp.pop %v899
  %v964 = vrcp.pop %v900
  %v965 = vrcp.pop %v901
  %v966 = vrcp.pop %v902
  %v967 = vrcp.pop %v903
  %v968 = vrcp.pop %v904
  %v969 = vrcp.pop %v905
  %v970 = vrcp.pop %v906
  %v971 = vrcp.pop %v907
  %v972 = vrcp.pop %v908
  %v973 = vrcp.pop %v909
  %v974 = vrcp.pop %v910
  %v975 = vrcp.pop %v911
  %v976 = vrcp.pop %v912
  %v977 = vrcp.pop %v913
  %v978 = vrcp.pop %v914
  %v979 = vrcp.pop %v915
  %v980 = vrcp.pop %v916
  %v981 = vrcp.pop %v917
  %v982 = vrcp.pop %v918
  %v983 = vmul.f32 %v919, 2.0
  %v984 = vmul.f32 %v920, 2.0
  %v985 = vmul.f32 %v921, 2.0
  %v986 = vmul.f32 %v922, 2.0
  %v987 = vmul.f32 %v923, 2.0
  %v988 = vmul.f32 %v924, 2.0
  %v989 = vmul.f32 %v925, 2.0
  %v990 = vmul.f32 %v926, 2.0
  %v991 = vmul.f32 %v927, 2.0
  %v992 = vmul.f32 %v928, 2.0
  %v993 = vmul.f32 %v929, 2.0
  %v994 = vmul.f32 %v930, 2.0
  %v995 = vmul.f32 %v931, 2.0
  %v996 = vmul.f32 %v932, 2.0
  %v997 = vmul.f32 %v933, 2.0
  %v998 = vmul.f32 %v934, 2.0
  %v999 = vmul.f32 %v935, 2.0
  %v1000 = vmul.f32 %v936, 2.0
  %v1001 = vmul.f32 %v937, 2.0
  %v1002 = vmul.f32 %v938, 2.0
  %v1003 = vmul.f32 %v939, 2.0
  %v1004 = vmul.f32 %v940, 2.0
  %v1005 = vmul.f32 %v941, 2.0
  %v1006 = vmul.f32 %v942, 2.0
  %v1007 = vmul.f32 %v943, 2.0
  %v1008 = vmul.f32 %v944, 2.0
  %v1009 = vmul.f32 %v945, 2.0
  %v1010 = vmul.f32 %v946, 2.0
  %v1011 = vmul.f32 %v947, 2.0
  %v1012 = vmul.f32 %v948, 2.0
  %v1013 = vmul.f32 %v949, 2.0
  %v1014 = vmul.f32 %v950, 2.0
  %v1015 = vmul.f32 %v951, 2.0
  %v1016 = vmul.f32 %v952, 2.0
  %v1017 = vmul.f32 %v953, 2.0
  %v1018 = vmul.f32 %v954, 2.0
  %v1019 = vmul.f32 %v955, 2.0
  %v1020 = vmul.f32 %v956, 2.0
  %v1021 = vmul.f32 %v957, 2.0
  %v1022 = vmul.f32 %v958, 2.0
  %v1023 = vmul.f32 %v959, 2.0
  %v1024 = vmul.f32 %v960, 2.0
  %v1025 = vmul.f32 %v961, 2.0
  %v1026 = vmul.f32 %v962, 2.0
  %v1027 = vmul.f32 %v963, 2.0
  %v1028 = vmul.f32 %v964, 2.0
  %v1029 = vmul.f32 %v965, 2.0
  %v1030 = vmul.f32 %v966, 2.0
  %v1031 = vmul.f32 %v967, 2.0
  %v1032 = vmul.f32 %v968, 2.0
  %v1033 = vmul.f32 %v969, 2.0
  %v1034 = vmul.f32 %v970, 2.0
  %v1035 = vmul.f32 %v971, 2.0
  %v1036 = vmul.f32 %v972, 2.0
  %v1037 = vmul.f32 %v973, 2.0
  %v1038 = vmul.f32 %v974, 2.0
  %v1039 = vmul.f32 %v975, 2.0
  %v1040 = vmul.f32 %v976, 2.0
  %v1041 = vmul.f32 %v977, 2.0
  %v1042 = vmul.f32 %v978, 2.0
  %v1043 = vmul.f32 %v979, 2.0
  %v1044 = vmul.f32 %v980, 2.0
  %v1045 = vmul.f32 %v981, 2.0
  %v1046 = vmul.f32 %v982, 2.0
  %vm1047 = vcmp.lt.s32.totalorder %v534, 18
  %vm1048 = vcmp.lt.s32.totalorder %v534, 27
  %v1049 = vsel %vm1048, %v983, %v374
  %v1050 = vsel %vm1048, %v984, %v376
  %v1051 = vsel %vm1048, %v985, %v379
  %v1052 = vsel %vm1048, %v986, %v381
  %v1053 = vsel %vm1048, %v987, %v384
  %v1054 = vsel %vm1048, %v988, %v386
  %v1055 = vsel %vm1048, %v989, %v389
  %v1056 = vsel %vm1048, %v990, %v391
  %v1057 = vsel %vm1048, %v991, %v394
  %v1058 = vsel %vm1048, %v992, %v396
  %v1059 = vsel %vm1048, %v993, %v399
  %v1060 = vsel %vm1048, %v994, %v401
  %v1061 = vsel %vm1048, %v995, %v404
  %v1062 = vsel %vm1048, %v996, %v406
  %v1063 = vsel %vm1048, %v997, %v409
  %v1064 = vsel %vm1048, %v998, %v411
  %v1065 = vsel %vm1048, %v999, %v414
  %v1066 = vsel %vm1048, %v1000, %v416
  %v1067 = vsel %vm1048, %v1001, %v419
  %v1068 = vsel %vm1048, %v1002, %v421
  %v1069 = vsel %vm1048, %v1003, %v424
  %v1070 = vsel %vm1048, %v1004, %v426
  %v1071 = vsel %vm1048, %v1005, %v429
  %v1072 = vsel %vm1048, %v1006, %v431
  %v1073 = vsel %vm1048, %v1007, %v434
  %v1074 = vsel %vm1048, %v1008, %v436
  %v1075 = vsel %vm1048, %v1009, %v439
  %v1076 = vsel %vm1048, %v1010, %v441
  %v1077 = vsel %vm1048, %v1011, %v444
  %v1078 = vsel %vm1048, %v1012, %v446
  %v1079 = vsel %vm1048, %v1013, %v449
  %v1080 = vsel %vm1048, %v1014, %v451
  %v1081 = vsel %vm1048, %v1015, %v454
  %v1082 = vsel %vm1048, %v1016, %v456
  %v1083 = vsel %vm1048, %v1017, %v459
  %v1084 = vsel %vm1048, %v1018, %v461
  %v1085 = vsel %vm1048, %v1019, %v464
  %v1086 = vsel %vm1048, %v1020, %v466
  %v1087 = vsel %vm1048, %v1021, %v469
  %v1088 = vsel %vm1048, %v1022, %v471
  %v1089 = vsel %vm1048, %v1023, %v474
  %v1090 = vsel %vm1048, %v1024, %v476
  %v1091 = vsel %vm1048, %v1025, %v479
  %v1092 = vsel %vm1048, %v1026, %v481
  %v1093 = vsel %vm1048, %v1027, %v484
  %v1094 = vsel %vm1048, %v1028, %v486
  %v1095 = vsel %vm1048, %v1029, %v489
  %v1096 = vsel %vm1048, %v1030, %v491
  %v1097 = vsel %vm1048, %v1031, %v494
  %v1098 = vsel %vm1048, %v1032, %v496
  %v1099 = vsel %vm1048, %v1033, %v499
  %v1100 = vsel %vm1048, %v1034, %v501
  %v1101 = vsel %vm1048, %v1035, %v504
  %v1102 = vsel %vm1048, %v1036, %v506
  %v1103 = vsel %vm1048, %v1037, %v509
  %v1104 = vsel %vm1048, %v1038, %v511
  %v1105 = vsel %vm1048, %v1039, %v514
  %v1106 = vsel %vm1048, %v1040, %v516
  %v1107 = vsel %vm1048, %v1041, %v519
  %v1108 = vsel %vm1048, %v1042, %v521
  %v1109 = vsel %vm1048, %v1043, %v524
  %v1110 = vsel %vm1048, %v1044, %v526
  %v1111 = vsel %vm1048, %v1045, %v529
  %v1112 = vsel %vm1048, %v1046, %v531
  %v1113 = vsel %vm1047, %v599, %v1049
  %v1114 = vsel %vm1047, %v600, %v1050
  %v1115 = vsel %vm1047, %v601, %v1051
  %v1116 = vsel %vm1047, %v602, %v1052
  %v1117 = vsel %vm1047, %v603, %v1053
  %v1118 = vsel %vm1047, %v604, %v1054
  %v1119 = vsel %vm1047, %v605, %v1055
  %v1120 = vsel %vm1047, %v606, %v1056
  %v1121 = vsel %vm1047, %v607, %v1057
  %v1122 = vsel %vm1047, %v608, %v1058
  %v1123 = vsel %vm1047, %v609, %v1059
  %v1124 = vsel %vm1047, %v610, %v1060
  %v1125 = vsel %vm1047, %v611, %v1061
  %v1126 = vsel %vm1047, %v612, %v1062
  %v1127 = vsel %vm1047, %v613, %v1063
  %v1128 = vsel %vm1047, %v614, %v1064
  %v1129 = vsel %vm1047, %v615, %v1065
  %v1130 = vsel %vm1047, %v616, %v1066
  %v1131 = vsel %vm1047, %v617, %v1067
  %v1132 = vsel %vm1047, %v618, %v1068
  %v1133 = vsel %vm1047, %v619, %v1069
  %v1134 = vsel %vm1047, %v620, %v1070
  %v1135 = vsel %vm1047, %v621, %v1071
  %v1136 = vsel %vm1047, %v622, %v1072
  %v1137 = vsel %vm1047, %v623, %v1073
  %v1138 = vsel %vm1047, %v624, %v1074
  %v1139 = vsel %vm1047, %v625, %v1075
  %v1140 = vsel %vm1047, %v626, %v1076
  %v1141 = vsel %vm1047, %v627, %v1077
  %v1142 = vsel %vm1047, %v628, %v1078
  %v1143 = vsel %vm1047, %v629, %v1079
  %v1144 = vsel %vm1047, %v630, %v1080
  %v1145 = vsel %vm1047, %v631, %v1081
  %v1146 = vsel %vm1047, %v632, %v1082
  %v1147 = vsel %vm1047, %v633, %v1083
  %v1148 = vsel %vm1047, %v634, %v1084
  %v1149 = vsel %vm1047, %v635, %v1085
  %v1150 = vsel %vm1047, %v636, %v1086
  %v1151 = vsel %vm1047, %v637, %v1087
  %v1152 = vsel %vm1047, %v638, %v1088
  %v1153 = vsel %vm1047, %v639, %v1089
  %v1154 = vsel %vm1047, %v640, %v1090
  %v1155 = vsel %vm1047, %v641, %v1091
  %v1156 = vsel %vm1047, %v642, %v1092
  %v1157 = vsel %vm1047, %v643, %v1093
  %v1158 = vsel %vm1047, %v644, %v1094
  %v1159 = vsel %vm1047, %v645, %v1095
  %v1160 = vsel %vm1047, %v646, %v1096
  %v1161 = vsel %vm1047, %v647, %v1097
  %v1162 = vsel %vm1047, %v648, %v1098
  %v1163 = vsel %vm1047, %v649, %v1099
  %v1164 = vsel %vm1047, %v650, %v1100
  %v1165 = vsel %vm1047, %v651, %v1101
  %v1166 = vsel %vm1047, %v652, %v1102
  %v1167 = vsel %vm1047, %v653, %v1103
  %v1168 = vsel %vm1047, %v654, %v1104
  %v1169 = vsel %vm1047, %v655, %v1105
  %v1170 = vsel %vm1047, %v656, %v1106
  %v1171 = vsel %vm1047, %v657, %v1107
  %v1172 = vsel %vm1047, %v658, %v1108
  %v1173 = vsel %vm1047, %v659, %v1109
  %v1174 = vsel %vm1047, %v660, %v1110
  %v1175 = vsel %vm1047, %v661, %v1111
  %v1176 = vsel %vm1047, %v662, %v1112
  %1177 = vst [vmem:[%s3] sm:$0xff] %v1113
  %1178 = vst [vmem:[%s3 + $0x8] sm:$0xff] %v1114
  %1179 = vst [vmem:[%s3 + $0x10] sm:$0xff] %v1115
  %1180 = vst [vmem:[%s3 + $0x18] sm:$0xff] %v1116
  %1181 = vst [vmem:[%s3 + $0x20] sm:$0xff] %v1117
  %1182 = vst [vmem:[%s3 + $0x28] sm:$0xff] %v1118
  %1183 = vst [vmem:[%s3 + $0x30] sm:$0xff] %v1119
  %1184 = vst [vmem:[%s3 + $0x38] sm:$0xff] %v1120
  %1185 = vst [vmem:[%s3 + $0x40] sm:$0xff] %v1121
  %1186 = vst [vmem:[%s3 + $0x48] sm:$0xff] %v1122
  %1187 = vst [vmem:[%s3 + $0x50] sm:$0xff] %v1123
  %1188 = vst [vmem:[%s3 + $0x58] sm:$0xff] %v1124
  %1189 = vst [vmem:[%s3 + $0x60] sm:$0xff] %v1125
  %1190 = vst [vmem:[%s3 + $0x68] sm:$0xff] %v1126
  %1191 = vst [vmem:[%s3 + $0x70] sm:$0xff] %v1127
  %1192 = vst [vmem:[%s3 + $0x78] sm:$0xff] %v1128
  %1193 = vst [vmem:[%s3 + $0x80] sm:$0xff] %v1129
  %1194 = vst [vmem:[%s3 + $0x88] sm:$0xff] %v1130
  %1195 = vst [vmem:[%s3 + $0x90] sm:$0xff] %v1131
  %1196 = vst [vmem:[%s3 + $0x98] sm:$0xff] %v1132
  %1197 = vst [vmem:[%s3 + $0xa0] sm:$0xff] %v1133
  %1198 = vst [vmem:[%s3 + $0xa8] sm:$0xff] %v1134
  %1199 = vst [vmem:[%s3 + $0xb0] sm:$0xff] %v1135
  %1200 = vst [vmem:[%s3 + $0xb8] sm:$0xff] %v1136
  %1201 = vst [vmem:[%s3 + $0xc0] sm:$0xff] %v1137
  %1202 = vst [vmem:[%s3 + $0xc8] sm:$0xff] %v1138
  %1203 = vst [vmem:[%s3 + $0xd0] sm:$0xff] %v1139
  %1204 = vst [vmem:[%s3 + $0xd8] sm:$0xff] %v1140
  %1205 = vst [vmem:[%s3 + $0xe0] sm:$0xff] %v1141
  %1206 = vst [vmem:[%s3 + $0xe8] sm:$0xff] %v1142
  %1207 = vst [vmem:[%s3 + $0xf0] sm:$0xff] %v1143
  %1208 = vst [vmem:[%s3 + $0xf8] sm:$0xff] %v1144
  %1209 = vst [vmem:[%s3 + $0x100] sm:$0xff] %v1145
  %1210 = vst [vmem:[%s3 + $0x108] sm:$0xff] %v1146
  %1211 = vst [vmem:[%s3 + $0x110] sm:$0xff] %v1147
  %1212 = vst [vmem:[%s3 + $0x118] sm:$0xff] %v1148
  %1213 = vst [vmem:[%s3 + $0x120] sm:$0xff] %v1149
  %1214 = vst [vmem:[%s3 + $0x128] sm:$0xff] %v1150
  %1215 = vst [vmem:[%s3 + $0x130] sm:$0xff] %v1151
  %1216 = vst [vmem:[%s3 + $0x138] sm:$0xff] %v1152
  %1217 = vst [vmem:[%s3 + $0x140] sm:$0xff] %v1153
  %1218 = vst [vmem:[%s3 + $0x148] sm:$0xff] %v1154
  %1219 = vst [vmem:[%s3 + $0x150] sm:$0xff] %v1155
  %1220 = vst [vmem:[%s3 + $0x158] sm:$0xff] %v1156
  %1221 = vst [vmem:[%s3 + $0x160] sm:$0xff] %v1157
  %1222 = vst [vmem:[%s3 + $0x168] sm:$0xff] %v1158
  %1223 = vst [vmem:[%s3 + $0x170] sm:$0xff] %v1159
  %1224 = vst [vmem:[%s3 + $0x178] sm:$0xff] %v1160
  %1225 = vst [vmem:[%s3 + $0x180] sm:$0xff] %v1161
  %1226 = vst [vmem:[%s3 + $0x188] sm:$0xff] %v1162
  %1227 = vst [vmem:[%s3 + $0x190] sm:$0xff] %v1163
  %1228 = vst [vmem:[%s3 + $0x198] sm:$0xff] %v1164
  %1229 = vst [vmem:[%s3 + $0x1a0] sm:$0xff] %v1165
  %1230 = vst [vmem:[%s3 + $0x1a8] sm:$0xff] %v1166
  %1231 = vst [vmem:[%s3 + $0x1b0] sm:$0xff] %v1167
  %1232 = vst [vmem:[%s3 + $0x1b8] sm:$0xff] %v1168
  %1233 = vst [vmem:[%s3 + $0x1c0] sm:$0xff] %v1169
  %1234 = vst [vmem:[%s3 + $0x1c8] sm:$0xff] %v1170
  %1235 = vst [vmem:[%s3 + $0x1d0] sm:$0xff] %v1171
  %1236 = vst [vmem:[%s3 + $0x1d8] sm:$0xff] %v1172
  %1237 = vst [vmem:[%s3 + $0x1e0] sm:$0xff] %v1173
  %1238 = vst [vmem:[%s3 + $0x1e8] sm:$0xff] %v1174
  %1239 = vst [vmem:[%s3 + $0x1f0] sm:$0xff] %v1175
  %1240 = vst [vmem:[%s3 + $0x1f8] sm:$0xff] %v1176
  // Predicated region
  $region14: #{deformable_conv2d_forward.2} parent=0 // pred_check
    _
  $region15: #{deformable_conv2d_forward.2} parent=0 // pred_check_branch
    %1242 = sbr.rel (0) target = $region17
  $region16: #{deformable_conv2d_forward.2} parent=0 // pred_region
    _
  $region17: #{deformable_conv2d_forward.2} parent=0 // pred_fallthru
    _
  // Predicated region
  $region18: #{deformable_conv2d_forward.2} parent=0 // pred_check
    _
  $region19: #{deformable_conv2d_forward.2} parent=0 // pred_check_branch
    %1244 = sbr.rel (0) target = $region21
  $region20: #{deformable_conv2d_forward.2} parent=0 // pred_region
    _
  $region21: #{deformable_conv2d_forward.2} parent=0 // pred_fallthru
    _

// kernel: mul.8
$region0: #{mul.8}
  #allocation0 [shape = 's32[1]{0}', space=sflag, size = 0x4, scoped, tag = 'scoped memory for mul.8']
  %s0 = inlined_call_operand.vmem [shape: f32[512,36], index: 0, kind: input, shape index: {}]
  %s1 = inlined_call_operand.vmem [shape: f32[512,36], index: 1, kind: input, shape index: {}]
  %s2 = inlined_call_operand.vmem [shape: f32[512,36], index: 2, kind: output, shape index: {}]
  %v3 = vld [vmem:[%s0] sm:$0xff]
  %v4 = vld [vmem:[%s1] sm:$0xff]
  %5 = xla_tuple %v3, %v4
  %6 = xla_tuple %5
  %v7 = vmul.f32 %v3, %v4
  %8 = xla_tuple %v7
  %9 = vst [vmem:[%s2] sm:$0xff] %v7
  %s10 = scalar_lea.vmem %s0, 32
  %v11 = vld [vmem:[%s10] sm:$0xff]
  %s12 = scalar_lea.vmem %s1, 32
  %v13 = vld [vmem:[%s12] sm:$0xff]
  %14 = xla_tuple %v11, %v13
  %15 = xla_tuple %14
  %v16 = vmul.f32 %v11, %v13
  %17 = xla_tuple %v16
  %s18 = scalar_lea.vmem %s2, 32
  %19 = vst [vmem:[%s18] sm:$0xff] %v16
  %s20 = scalar_lea.vmem %s0, 64
  %v21 = vld [vmem:[%s20] sm:$0xff]
  %s22 = scalar_lea.vmem %s1, 64
  %v23 = vld [vmem:[%s22] sm:$0xff]
  %24 = xla_tuple %v21, %v23
  %25 = xla_tuple %24
  %v26 = vmul.f32 %v21, %v23
  %27 = xla_tuple %v26
  %s28 = scalar_lea.vmem %s2, 64
  %29 = vst [vmem:[%s28] sm:$0xff] %v26
  %s30 = scalar_lea.vmem %s0, 96
  %v31 = vld [vmem:[%s30] sm:$0xff]
  %s32 = scalar_lea.vmem %s1, 96
  %v33 = vld [vmem:[%s32] sm:$0xff]
  %34 = xla_tuple %v31, %v33
  %35 = xla_tuple %34
  %v36 = vmul.f32 %v31, %v33
  %37 = xla_tuple %v36
  %s38 = scalar_lea.vmem %s2, 96
  %39 = vst [vmem:[%s38] sm:$0xff] %v36
  %s40 = scalar_lea.vmem %s0, 128
  %v41 = vld [vmem:[%s40] sm:$0xff]
  %s42 = scalar_lea.vmem %s1, 128
  %v43 = vld [vmem:[%s42] sm:$0xff]
  %44 = xla_tuple %v41, %v43
  %45 = xla_tuple %44
  %v46 = vmul.f32 %v41, %v43
  %47 = xla_tuple %v46
  %s48 = scalar_lea.vmem %s2, 128
  %49 = vst [vmem:[%s48] sm:$0xff] %v46
  %s50 = scalar_lea.vmem %s0, 8
  %v51 = vld [vmem:[%s50] sm:$0xff]
  %s52 = scalar_lea.vmem %s1, 8
  %v53 = vld [vmem:[%s52] sm:$0xff]
  %54 = xla_tuple %v51, %v53
  %55 = xla_tuple %54
  %v56 = vmul.f32 %v51, %v53
  %57 = xla_tuple %v56
  %s58 = scalar_lea.vmem %s2, 8
  %59 = vst [vmem:[%s58] sm:$0xff] %v56
  %s60 = scalar_lea.vmem %s0, 40
  %v61 = vld [vmem:[%s60] sm:$0xff]
  %s62 = scalar_lea.vmem %s1, 40
  %v63 = vld [vmem:[%s62] sm:$0xff]
  %64 = xla_tuple %v61, %v63
  %65 = xla_tuple %64
  %v66 = vmul.f32 %v61, %v63
  %67 = xla_tuple %v66
  %s68 = scalar_lea.vmem %s2, 40
  %69 = vst [vmem:[%s68] sm:$0xff] %v66
  %s70 = scalar_lea.vmem %s0, 72
  %v71 = vld [vmem:[%s70] sm:$0xff]
  %s72 = scalar_lea.vmem %s1, 72
  %v73 = vld [vmem:[%s72] sm:$0xff]
  %74 = xla_tuple %v71, %v73
  %75 = xla_tuple %74
  %v76 = vmul.f32 %v71, %v73
  %77 = xla_tuple %v76
  %s78 = scalar_lea.vmem %s2, 72
  %79 = vst [vmem:[%s78] sm:$0xff] %v76
  %s80 = scalar_lea.vmem %s0, 104
  %v81 = vld [vmem:[%s80] sm:$0xff]
  %s82 = scalar_lea.vmem %s1, 104
  %v83 = vld [vmem:[%s82] sm:$0xff]
  %84 = xla_tuple %v81, %v83
  %85 = xla_tuple %84
  %v86 = vmul.f32 %v81, %v83
  %87 = xla_tuple %v86
  %s88 = scalar_lea.vmem %s2, 104
  %89 = vst [vmem:[%s88] sm:$0xff] %v86
  %s90 = scalar_lea.vmem %s0, 136
  %v91 = vld [vmem:[%s90] sm:$0xff]
  %s92 = scalar_lea.vmem %s1, 136
  %v93 = vld [vmem:[%s92] sm:$0xff]
  %94 = xla_tuple %v91, %v93
  %95 = xla_tuple %94
  %v96 = vmul.f32 %v91, %v93
  %97 = xla_tuple %v96
  %s98 = scalar_lea.vmem %s2, 136
  %99 = vst [vmem:[%s98] sm:$0xff] %v96
  %s100 = scalar_lea.vmem %s0, 16
  %v101 = vld [vmem:[%s100] sm:$0xff]
  %s102 = scalar_lea.vmem %s1, 16
  %v103 = vld [vmem:[%s102] sm:$0xff]
  %104 = xla_tuple %v101, %v103
  %105 = xla_tuple %104
  %v106 = vmul.f32 %v101, %v103
  %107 = xla_tuple %v106
  %s108 = scalar_lea.vmem %s2, 16
  %109 = vst [vmem:[%s108] sm:$0xff] %v106
  %s110 = scalar_lea.vmem %s0, 48
  %v111 = vld [vmem:[%s110] sm:$0xff]
  %s112 = scalar_lea.vmem %s1, 48
  %v113 = vld [vmem:[%s112] sm:$0xff]
  %114 = xla_tuple %v111, %v113
  %115 = xla_tuple %114
  %v116 = vmul.f32 %v111, %v113
  %117 = xla_tuple %v116
  %s118 = scalar_lea.vmem %s2, 48
  %119 = vst [vmem:[%s118] sm:$0xff] %v116
  %s120 = scalar_lea.vmem %s0, 80
  %v121 = vld [vmem:[%s120] sm:$0xff]
  %s122 = scalar_lea.vmem %s1, 80
  %v123 = vld [vmem:[%s122] sm:$0xff]
  %124 = xla_tuple %v121, %v123
  %125 = xla_tuple %124
  %v126 = vmul.f32 %v121, %v123
  %127 = xla_tuple %v126
  %s128 = scalar_lea.vmem %s2, 80
  %129 = vst [vmem:[%s128] sm:$0xff] %v126
  %s130 = scalar_lea.vmem %s0, 112
  %v131 = vld [vmem:[%s130] sm:$0xff]
  %s132 = scalar_lea.vmem %s1, 112
  %v133 = vld [vmem:[%s132] sm:$0xff]
  %134 = xla_tuple %v131, %v133
  %135 = xla_tuple %134
  %v136 = vmul.f32 %v131, %v133
  %137 = xla_tuple %v136
  %s138 = scalar_lea.vmem %s2, 112
  %139 = vst [vmem:[%s138] sm:$0xff] %v136
  %s140 = scalar_lea.vmem %s0, 144
  %v141 = vld [vmem:[%s140] sm:$0xff]
  %s142 = scalar_lea.vmem %s1, 144
  %v143 = vld [vmem:[%s142] sm:$0xff]
  %144 = xla_tuple %v141, %v143
  %145 = xla_tuple %144
  %v146 = vmul.f32 %v141, %v143
  %147 = xla_tuple %v146
  %s148 = scalar_lea.vmem %s2, 144
  %149 = vst [vmem:[%s148] sm:$0xff] %v146
  %s150 = scalar_lea.vmem %s0, 24
  %v151 = vld [vmem:[%s150] sm:$0xff]
  %s152 = scalar_lea.vmem %s1, 24
  %v153 = vld [vmem:[%s152] sm:$0xff]
  %154 = xla_tuple %v151, %v153
  %155 = xla_tuple %154
  %v156 = vmul.f32 %v151, %v153
  %157 = xla_tuple %v156
  %s158 = scalar_lea.vmem %s2, 24
  %159 = vst [vmem:[%s158] sm:$0xff] %v156
  %s160 = scalar_lea.vmem %s0, 56
  %v161 = vld [vmem:[%s160] sm:$0xff]
  %s162 = scalar_lea.vmem %s1, 56
  %v163 = vld [vmem:[%s162] sm:$0xff]
  %164 = xla_tuple %v161, %v163
  %165 = xla_tuple %164
  %v166 = vmul.f32 %v161, %v163
  %167 = xla_tuple %v166
  %s168 = scalar_lea.vmem %s2, 56
  %169 = vst [vmem:[%s168] sm:$0xff] %v166
  %s170 = scalar_lea.vmem %s0, 88
  %v171 = vld [vmem:[%s170] sm:$0xff]
  %s172 = scalar_lea.vmem %s1, 88
  %v173 = vld [vmem:[%s172] sm:$0xff]
  %174 = xla_tuple %v171, %v173
  %175 = xla_tuple %174
  %v176 = vmul.f32 %v171, %v173
  %177 = xla_tuple %v176
  %s178 = scalar_lea.vmem %s2, 88
  %179 = vst [vmem:[%s178] sm:$0xff] %v176
  %s180 = scalar_lea.vmem %s0, 120
  %v181 = vld [vmem:[%s180] sm:$0xff]
  %s182 = scalar_lea.vmem %s1, 120
  %v183 = vld [vmem:[%s182] sm:$0xff]
  %184 = xla_tuple %v181, %v183
  %185 = xla_tuple %184
  %v186 = vmul.f32 %v181, %v183
  %187 = xla_tuple %v186
  %s188 = scalar_lea.vmem %s2, 120
  %189 = vst [vmem:[%s188] sm:$0xff] %v186
  %s190 = scalar_lea.vmem %s0, 152
  %v191 = vld [vmem:[%s190] sm:$0xff]
  %s192 = scalar_lea.vmem %s1, 152
  %v193 = vld [vmem:[%s192] sm:$0xff]
  %194 = xla_tuple %v191, %v193
  %195 = xla_tuple %194
  %v196 = vmul.f32 %v191, %v193
  %197 = xla_tuple %v196
  %s198 = scalar_lea.vmem %s2, 152
  %199 = vst [vmem:[%s198] sm:$0xff] %v196

// kernel: deformable_conv2d_forward.3
$region0: #{deformable_conv2d_forward.3}
  #allocation0 [shape = 'u32[]', space=smem, size = 0x4, offset = 0x4, fixed_abs, tag = 'smem constant byte address 0x4 - core index']
  #allocation1 [shape = 'u32[72,128]{1,0:T(1,128)}', space=vmem, size = 0x9000, scoped, tag = 'internal scratch']
  %s0 = inlined_call_operand.vmem [shape: bf16[512,36], index: 0, kind: input, shape index: {}]
  %s1 = inlined_call_operand.vmem [shape: bf16[36,128], index: 1, kind: input, shape index: {}]
  %s2 = inlined_call_operand.vmem [shape: f32[1,128], index: 2, kind: input, shape index: {}]
  %s3 = inlined_call_operand.hbm [shape: f32[512,128], index: 3, kind: output, shape index: {}]
  %s4 = sld [smem:[#allocation0]]
  $region22: #{deformable_conv2d_forward.3} parent=0
    _
  %s6 = ssub.s32 1, %s4
  %s7 = scalar_select 0, %s6, %s4
  $region1: #{deformable_conv2d_forward.3} parent=0
    #allocation2 [shape = 'u8[262144]{0}', space=vmem, size = 0x40000, scoped, tag = 'output window, operand 0, single buffered']
    #allocation3 [shape = 's32[1]{0}', space=sflag, size = 0x4, scoped, tag = 'scoped memory for deformable_conv2d_forward.3']
    %8 = vsyncpa [#allocation3], 0
    // Predicated region
    $region2: #{deformable_conv2d_forward.3} parent=1 // pred_check
      _
    $region3: #{deformable_conv2d_forward.3} parent=1 // pred_check_branch
      %10 = sbr.rel (0) target = $region5
    $region4: #{deformable_conv2d_forward.3} parent=1 // pred_region
      _
    $region5: #{deformable_conv2d_forward.3} parent=1 // pred_fallthru
      _
    // Predicated region
    $region6: #{deformable_conv2d_forward.3} parent=1 // pred_check
      _
    $region7: #{deformable_conv2d_forward.3} parent=1 // pred_check_branch
      %12 = sbr.rel (0) target = $region9
    $region8: #{deformable_conv2d_forward.3} parent=1 // pred_region
      _
    $region9: #{deformable_conv2d_forward.3} parent=1 // pred_fallthru
      _
    // Predicated region
    $region10: #{deformable_conv2d_forward.3} parent=1 // pred_check
      _
    $region11: #{deformable_conv2d_forward.3} parent=1 // pred_check_branch
      %14 = sbr.rel (0) target = $region13
    $region12: #{deformable_conv2d_forward.3} parent=1 // pred_region
      _
    $region13: #{deformable_conv2d_forward.3} parent=1 // pred_fallthru
      _
    %v16 = vld [vmem:[%s0] sm:$0xf]
    %v17 = vld [vmem:[%s0 + $0x4] sm:$0xf]
    %v18 = vld [vmem:[%s0 + $0x8] sm:$0xf]
    %v19 = vld [vmem:[%s0 + $0xc] sm:$0xf]
    %v20 = vld [vmem:[%s0 + $0x10] sm:$0xf]
    %v21 = vld [vmem:[%s0 + $0x14] sm:$0xf]
    %v22 = vld [vmem:[%s0 + $0x18] sm:$0xf]
    %v23 = vld [vmem:[%s0 + $0x1c] sm:$0xf]
    %v24 = vld [vmem:[%s0 + $0x20] sm:$0xf]
    %v25 = vld [vmem:[%s0 + $0x24] sm:$0xf]
    %v26 = vld [vmem:[%s0 + $0x28] sm:$0xf]
    %v27 = vld [vmem:[%s0 + $0x2c] sm:$0xf]
    %v28 = vld [vmem:[%s0 + $0x30] sm:$0xf]
    %v29 = vld [vmem:[%s0 + $0x34] sm:$0xf]
    %v30 = vld [vmem:[%s0 + $0x38] sm:$0xf]
    %v31 = vld [vmem:[%s0 + $0x3c] sm:$0xf]
    %v32 = vld [vmem:[%s0 + $0x40] sm:$0xf]
    %v33 = vld [vmem:[%s0 + $0x44] sm:$0xf]
    %v34 = vld [vmem:[%s0 + $0x48] sm:$0xf]
    %v35 = vld [vmem:[%s0 + $0x4c] sm:$0xf]
    %v36 = vld [vmem:[%s0 + $0x50] sm:$0xf]
    %v37 = vld [vmem:[%s0 + $0x54] sm:$0xf]
    %v38 = vld [vmem:[%s0 + $0x58] sm:$0xf]
    %v39 = vld [vmem:[%s0 + $0x5c] sm:$0xf]
    %v40 = vld [vmem:[%s0 + $0x60] sm:$0xf]
    %v41 = vld [vmem:[%s0 + $0x64] sm:$0xf]
    %v42 = vld [vmem:[%s0 + $0x68] sm:$0xf]
    %v43 = vld [vmem:[%s0 + $0x6c] sm:$0xf]
    %v44 = vld [vmem:[%s0 + $0x70] sm:$0xf]
    %v45 = vld [vmem:[%s0 + $0x74] sm:$0xf]
    %v46 = vld [vmem:[%s0 + $0x78] sm:$0xf]
    %v47 = vld [vmem:[%s0 + $0x7c] sm:$0xf]
    %v48 = vld [vmem:[%s0 + $0x80] sm:$0xf]
    %v49 = vld [vmem:[%s0 + $0x84] sm:$0xf]
    %v50 = vld [vmem:[%s0 + $0x88] sm:$0xf]
    %v51 = vld [vmem:[%s0 + $0x8c] sm:$0xf]
    %v52 = vld [vmem:[%s0 + $0x90] sm:$0xf]
    %v53 = vld [vmem:[%s0 + $0x94] sm:$0xf]
    %v54 = vld [vmem:[%s0 + $0x98] sm:$0xf]
    %v55 = vld [vmem:[%s0 + $0x9c] sm:$0xf]
    %v56 = vld [vmem:[%s0 + $0xa0] sm:$0xf]
    %v57 = vld [vmem:[%s0 + $0xa4] sm:$0xf]
    %v58 = vld [vmem:[%s0 + $0xa8] sm:$0xf]
    %v59 = vld [vmem:[%s0 + $0xac] sm:$0xf]
    %v60 = vld [vmem:[%s0 + $0xb0] sm:$0xf]
    %v61 = vld [vmem:[%s0 + $0xb4] sm:$0xf]
    %v62 = vld [vmem:[%s0 + $0xb8] sm:$0xf]
    %v63 = vld [vmem:[%s0 + $0xbc] sm:$0xf]
    %v64 = vld [vmem:[%s0 + $0xc0] sm:$0xf]
    %v65 = vld [vmem:[%s0 + $0xc4] sm:$0xf]
    %v66 = vld [vmem:[%s0 + $0xc8] sm:$0xf]
    %v67 = vld [vmem:[%s0 + $0xcc] sm:$0xf]
    %v68 = vld [vmem:[%s0 + $0xd0] sm:$0xf]
    %v69 = vld [vmem:[%s0 + $0xd4] sm:$0xf]
    %v70 = vld [vmem:[%s0 + $0xd8] sm:$0xf]
    %v71 = vld [vmem:[%s0 + $0xdc] sm:$0xf]
    %v72 = vld [vmem:[%s0 + $0xe0] sm:$0xf]
    %v73 = vld [vmem:[%s0 + $0xe4] sm:$0xf]
    %v74 = vld [vmem:[%s0 + $0xe8] sm:$0xf]
    %v75 = vld [vmem:[%s0 + $0xec] sm:$0xf]
    %v76 = vld [vmem:[%s0 + $0xf0] sm:$0xf]
    %v77 = vld [vmem:[%s0 + $0xf4] sm:$0xf]
    %v78 = vld [vmem:[%s0 + $0xf8] sm:$0xf]
    %v79 = vld [vmem:[%s0 + $0xfc] sm:$0xf]
    %v80 = vld [vmem:[%s1] sm:$0xf]
    %v81 = vld [vmem:[%s1 + $0x4] sm:$0xf]
    %v82 = vld [vmem:[%s1 + $0x8] sm:$0xf]
    %v83 = vld [vmem:[%s1 + $0xc] sm:$0xf]
    %v84 = vld [vmem:[%s1 + $0x10] sm:$0x3]
    %v85 = vld [vmem:[%s2] sm:$0x1]
    %v87 = vperm.slane %v85, 0
    %v153 = vunpack.c.l.b16 %v16
    %v154 = vunpack.c.l.b16 %v17
    %v155 = vunpack.c.l.b16 %v18
    %v156 = vunpack.c.l.b16 %v19
    %v157 = vunpack.c.l.b16 %v20
    %v158 = vunpack.c.l.b16 %v21
    %v159 = vunpack.c.l.b16 %v22
    %v160 = vunpack.c.l.b16 %v23
    %v161 = vunpack.c.l.b16 %v24
    %v162 = vunpack.c.l.b16 %v25
    %v163 = vunpack.c.l.b16 %v26
    %v164 = vunpack.c.l.b16 %v27
    %v165 = vunpack.c.l.b16 %v28
    %v166 = vunpack.c.l.b16 %v29
    %v167 = vunpack.c.l.b16 %v30
    %v168 = vunpack.c.l.b16 %v31
    %v169 = vunpack.c.l.b16 %v32
    %v170 = vunpack.c.l.b16 %v33
    %v171 = vunpack.c.l.b16 %v34
    %v172 = vunpack.c.l.b16 %v35
    %v173 = vunpack.c.l.b16 %v36
    %v174 = vunpack.c.l.b16 %v37
    %v175 = vunpack.c.l.b16 %v38
    %v176 = vunpack.c.l.b16 %v39
    %v177 = vunpack.c.l.b16 %v40
    %v178 = vunpack.c.l.b16 %v41
    %v179 = vunpack.c.l.b16 %v42
    %v180 = vunpack.c.l.b16 %v43
    %v181 = vunpack.c.l.b16 %v44
    %v182 = vunpack.c.l.b16 %v45
    %v183 = vunpack.c.l.b16 %v46
    %v184 = vunpack.c.l.b16 %v47
    %v185 = vunpack.c.l.b16 %v48
    %v186 = vunpack.c.l.b16 %v49
    %v187 = vunpack.c.l.b16 %v50
    %v188 = vunpack.c.l.b16 %v51
    %v189 = vunpack.c.l.b16 %v52
    %v190 = vunpack.c.l.b16 %v53
    %v191 = vunpack.c.l.b16 %v54
    %v192 = vunpack.c.l.b16 %v55
    %v193 = vunpack.c.l.b16 %v56
    %v194 = vunpack.c.l.b16 %v57
    %v195 = vunpack.c.l.b16 %v58
    %v196 = vunpack.c.l.b16 %v59
    %v197 = vunpack.c.l.b16 %v60
    %v198 = vunpack.c.l.b16 %v61
    %v199 = vunpack.c.l.b16 %v62
    %v200 = vunpack.c.l.b16 %v63
    %v201 = vunpack.c.l.b16 %v64
    %v202 = vunpack.c.l.b16 %v65
    %v203 = vunpack.c.l.b16 %v66
    %v204 = vunpack.c.l.b16 %v67
    %v205 = vunpack.c.l.b16 %v68
    %v206 = vunpack.c.l.b16 %v69
    %v207 = vunpack.c.l.b16 %v70
    %v208 = vunpack.c.l.b16 %v71
    %v209 = vunpack.c.l.b16 %v72
    %v210 = vunpack.c.l.b16 %v73
    %v211 = vunpack.c.l.b16 %v74
    %v212 = vunpack.c.l.b16 %v75
    %v213 = vunpack.c.l.b16 %v76
    %v214 = vunpack.c.l.b16 %v77
    %v215 = vunpack.c.l.b16 %v78
    %v216 = vunpack.c.l.b16 %v79
    %v217 = vpack.c.b16 %v154, %v153
    %v218 = vpack.c.b16 %v156, %v155
    %v219 = vpack.c.b16 %v158, %v157
    %v220 = vpack.c.b16 %v160, %v159
    %v221 = vpack.c.b16 %v162, %v161
    %v222 = vpack.c.b16 %v164, %v163
    %v223 = vpack.c.b16 %v166, %v165
    %v224 = vpack.c.b16 %v168, %v167
    %v225 = vpack.c.b16 %v170, %v169
    %v226 = vpack.c.b16 %v172, %v171
    %v227 = vpack.c.b16 %v174, %v173
    %v228 = vpack.c.b16 %v176, %v175
    %v229 = vpack.c.b16 %v178, %v177
    %v230 = vpack.c.b16 %v180, %v179
    %v231 = vpack.c.b16 %v182, %v181
    %v232 = vpack.c.b16 %v184, %v183
    %v233 = vpack.c.b16 %v186, %v185
    %v234 = vpack.c.b16 %v188, %v187
    %v235 = vpack.c.b16 %v190, %v189
    %v236 = vpack.c.b16 %v192, %v191
    %v237 = vpack.c.b16 %v194, %v193
    %v238 = vpack.c.b16 %v196, %v195
    %v239 = vpack.c.b16 %v198, %v197
    %v240 = vpack.c.b16 %v200, %v199
    %v241 = vpack.c.b16 %v202, %v201
    %v242 = vpack.c.b16 %v204, %v203
    %v243 = vpack.c.b16 %v206, %v205
    %v244 = vpack.c.b16 %v208, %v207
    %v245 = vpack.c.b16 %v210, %v209
    %v246 = vpack.c.b16 %v212, %v211
    %v247 = vpack.c.b16 %v214, %v213
    %v248 = vpack.c.b16 %v216, %v215
    %v254 = vunpack.c.l.b16 %v80
    %v255 = vunpack.c.l.b16 %v81
    %v256 = vunpack.c.l.b16 %v82
    %v257 = vunpack.c.l.b16 %v83
    %v258 = vunpack.c.l.b16 %v84
    %v259 = vpack.c.b16 %v255, %v254
    %v260 = vpack.c.b16 %v257, %v256
    %v261 = vpack.c.b16 %v258, %v258
    %vm264 = vcmask 293888
    %v266 = vsel %vm264, %v217, 0
    %v269 = vsel %vm264, %v218, 0
    %v272 = vsel %vm264, %v219, 0
    %v275 = vsel %vm264, %v220, 0
    %v278 = vsel %vm264, %v221, 0
    %v281 = vsel %vm264, %v222, 0
    %v284 = vsel %vm264, %v223, 0
    %v287 = vsel %vm264, %v224, 0
    %v290 = vsel %vm264, %v225, 0
    %v293 = vsel %vm264, %v226, 0
    %v296 = vsel %vm264, %v227, 0
    %v299 = vsel %vm264, %v228, 0
    %v302 = vsel %vm264, %v229, 0
    %v305 = vsel %vm264, %v230, 0
    %v308 = vsel %vm264, %v231, 0
    %v311 = vsel %vm264, %v232, 0
    %v314 = vsel %vm264, %v233, 0
    %v317 = vsel %vm264, %v234, 0
    %v320 = vsel %vm264, %v235, 0
    %v323 = vsel %vm264, %v236, 0
    %v326 = vsel %vm264, %v237, 0
    %v329 = vsel %vm264, %v238, 0
    %v332 = vsel %vm264, %v239, 0
    %v335 = vsel %vm264, %v240, 0
    %v338 = vsel %vm264, %v241, 0
    %v341 = vsel %vm264, %v242, 0
    %v344 = vsel %vm264, %v243, 0
    %v347 = vsel %vm264, %v244, 0
    %v350 = vsel %vm264, %v245, 0
    %v353 = vsel %vm264, %v246, 0
    %v356 = vsel %vm264, %v247, 0
    %v359 = vsel %vm264, %v248, 0
    %vm361 = vcmask 1041408
    %v363 = vsel %vm361, %v261, 0
    %365 = vmatpush.bf16.msra.mxu0 0
    %366 = vmatpush.bf16.msra.mxu0 0
    %367 = vmatpush.bf16.msra.mxu0 0
    %368 = vmatpush.bf16.msra.mxu0 0
    %369 = vmatpush.bf16.msra.mxu0 0
    %370 = vmatpush.bf16.msra.mxu0 %v363
    %371 = vmatpush.bf16.msra.mxu0 %v260
    %372 = vmatpush.bf16.msra.mxu0 %v259
    %373 = vmatmul.bf16.gmra.mxu0 %v266
    %v374 = vpop.f32.mrf.mxu0
    %v375 = vadd.f32 %v87, %v374
    %v376 = vpop.f32.mrf.mxu0
    %v377 = vadd.f32 %v87, %v376
    %378 = vmatmul.bf16.gmra.mxu0 %v269
    %v379 = vpop.f32.mrf.mxu0
    %v380 = vadd.f32 %v87, %v379
    %v381 = vpop.f32.mrf.mxu0
    %v382 = vadd.f32 %v87, %v381
    %383 = vmatmul.bf16.gmra.mxu0 %v272
    %v384 = vpop.f32.mrf.mxu0
    %v385 = vadd.f32 %v87, %v384
    %v386 = vpop.f32.mrf.mxu0
    %v387 = vadd.f32 %v87, %v386
    %388 = vmatmul.bf16.gmra.mxu0 %v275
    %v389 = vpop.f32.mrf.mxu0
    %v390 = vadd.f32 %v87, %v389
    %v391 = vpop.f32.mrf.mxu0
    %v392 = vadd.f32 %v87, %v391
    %393 = vmatmul.bf16.gmra.mxu0 %v278
    %v394 = vpop.f32.mrf.mxu0
    %v395 = vadd.f32 %v87, %v394
    %v396 = vpop.f32.mrf.mxu0
    %v397 = vadd.f32 %v87, %v396
    %398 = vmatmul.bf16.gmra.mxu0 %v281
    %v399 = vpop.f32.mrf.mxu0
    %v400 = vadd.f32 %v87, %v399
    %v401 = vpop.f32.mrf.mxu0
    %v402 = vadd.f32 %v87, %v401
    %403 = vmatmul.bf16.gmra.mxu0 %v284
    %v404 = vpop.f32.mrf.mxu0
    %v405 = vadd.f32 %v87, %v404
    %v406 = vpop.f32.mrf.mxu0
    %v407 = vadd.f32 %v87, %v406
    %408 = vmatmul.bf16.gmra.mxu0 %v287
    %v409 = vpop.f32.mrf.mxu0
    %v410 = vadd.f32 %v87, %v409
    %v411 = vpop.f32.mrf.mxu0
    %v412 = vadd.f32 %v87, %v411
    %413 = vmatmul.bf16.gmra.mxu0 %v290
    %v414 = vpop.f32.mrf.mxu0
    %v415 = vadd.f32 %v87, %v414
    %v416 = vpop.f32.mrf.mxu0
    %v417 = vadd.f32 %v87, %v416
    %418 = vmatmul.bf16.gmra.mxu0 %v293
    %v419 = vpop.f32.mrf.mxu0
    %v420 = vadd.f32 %v87, %v419
    %v421 = vpop.f32.mrf.mxu0
    %v422 = vadd.f32 %v87, %v421
    %423 = vmatmul.bf16.gmra.mxu0 %v296
    %v424 = vpop.f32.mrf.mxu0
    %v425 = vadd.f32 %v87, %v424
    %v426 = vpop.f32.mrf.mxu0
    %v427 = vadd.f32 %v87, %v426
    %428 = vmatmul.bf16.gmra.mxu0 %v299
    %v429 = vpop.f32.mrf.mxu0
    %v430 = vadd.f32 %v87, %v429
    %v431 = vpop.f32.mrf.mxu0
    %v432 = vadd.f32 %v87, %v431
    %433 = vmatmul.bf16.gmra.mxu0 %v302
    %v434 = vpop.f32.mrf.mxu0
    %v435 = vadd.f32 %v87, %v434
    %v436 = vpop.f32.mrf.mxu0
    %v437 = vadd.f32 %v87, %v436
    %438 = vmatmul.bf16.gmra.mxu0 %v305
    %v439 = vpop.f32.mrf.mxu0
    %v440 = vadd.f32 %v87, %v439
    %v441 = vpop.f32.mrf.mxu0
    %v442 = vadd.f32 %v87, %v441
    %443 = vmatmul.bf16.gmra.mxu0 %v308
    %v444 = vpop.f32.mrf.mxu0
    %v445 = vadd.f32 %v87, %v444
    %v446 = vpop.f32.mrf.mxu0
    %v447 = vadd.f32 %v87, %v446
    %448 = vmatmul.bf16.gmra.mxu0 %v311
    %v449 = vpop.f32.mrf.mxu0
    %v450 = vadd.f32 %v87, %v449
    %v451 = vpop.f32.mrf.mxu0
    %v452 = vadd.f32 %v87, %v451
    %453 = vmatmul.bf16.gmra.mxu0 %v314
    %v454 = vpop.f32.mrf.mxu0
    %v455 = vadd.f32 %v87, %v454
    %v456 = vpop.f32.mrf.mxu0
    %v457 = vadd.f32 %v87, %v456
    %458 = vmatmul.bf16.gmra.mxu0 %v317
    %v459 = vpop.f32.mrf.mxu0
    %v460 = vadd.f32 %v87, %v459
    %v461 = vpop.f32.mrf.mxu0
    %v462 = vadd.f32 %v87, %v461
    %463 = vmatmul.bf16.gmra.mxu0 %v320
    %v464 = vpop.f32.mrf.mxu0
    %v465 = vadd.f32 %v87, %v464
    %v466 = vpop.f32.mrf.mxu0
    %v467 = vadd.f32 %v87, %v466
    %468 = vmatmul.bf16.gmra.mxu0 %v323
    %v469 = vpop.f32.mrf.mxu0
    %v470 = vadd.f32 %v87, %v469
    %v471 = vpop.f32.mrf.mxu0
    %v472 = vadd.f32 %v87, %v471
    %473 = vmatmul.bf16.gmra.mxu0 %v326
    %v474 = vpop.f32.mrf.mxu0
    %v475 = vadd.f32 %v87, %v474
    %v476 = vpop.f32.mrf.mxu0
    %v477 = vadd.f32 %v87, %v476
    %478 = vmatmul.bf16.gmra.mxu0 %v329
    %v479 = vpop.f32.mrf.mxu0
    %v480 = vadd.f32 %v87, %v479
    %v481 = vpop.f32.mrf.mxu0
    %v482 = vadd.f32 %v87, %v481
    %483 = vmatmul.bf16.gmra.mxu0 %v332
    %v484 = vpop.f32.mrf.mxu0
    %v485 = vadd.f32 %v87, %v484
    %v486 = vpop.f32.mrf.mxu0
    %v487 = vadd.f32 %v87, %v486
    %488 = vmatmul.bf16.gmra.mxu0 %v335
    %v489 = vpop.f32.mrf.mxu0
    %v490 = vadd.f32 %v87, %v489
    %v491 = vpop.f32.mrf.mxu0
    %v492 = vadd.f32 %v87, %v491
    %493 = vmatmul.bf16.gmra.mxu0 %v338
    %v494 = vpop.f32.mrf.mxu0
    %v495 = vadd.f32 %v87, %v494
    %v496 = vpop.f32.mrf.mxu0
    %v497 = vadd.f32 %v87, %v496
    %498 = vmatmul.bf16.gmra.mxu0 %v341
    %v499 = vpop.f32.mrf.mxu0
    %v500 = vadd.f32 %v87, %v499
    %v501 = vpop.f32.mrf.mxu0
    %v502 = vadd.f32 %v87, %v501
    %503 = vmatmul.bf16.gmra.mxu0 %v344
    %v504 = vpop.f32.mrf.mxu0
    %v505 = vadd.f32 %v87, %v504
    %v506 = vpop.f32.mrf.mxu0
    %v507 = vadd.f32 %v87, %v506
    %508 = vmatmul.bf16.gmra.mxu0 %v347
    %v509 = vpop.f32.mrf.mxu0
    %v510 = vadd.f32 %v87, %v509
    %v511 = vpop.f32.mrf.mxu0
    %v512 = vadd.f32 %v87, %v511
    %513 = vmatmul.bf16.gmra.mxu0 %v350
    %v514 = vpop.f32.mrf.mxu0
    %v515 = vadd.f32 %v87, %v514
    %v516 = vpop.f32.mrf.mxu0
    %v517 = vadd.f32 %v87, %v516
    %518 = vmatmul.bf16.gmra.mxu0 %v353
    %v519 = vpop.f32.mrf.mxu0
    %v520 = vadd.f32 %v87, %v519
    %v521 = vpop.f32.mrf.mxu0
    %v522 = vadd.f32 %v87, %v521
    %523 = vmatmul.bf16.gmra.mxu0 %v356
    %v524 = vpop.f32.mrf.mxu0
    %v525 = vadd.f32 %v87, %v524
    %v526 = vpop.f32.mrf.mxu0
    %v527 = vadd.f32 %v87, %v526
    %528 = vmatmul.bf16.gmra.mxu0 %v359
    %v529 = vpop.f32.mrf.mxu0
    %v530 = vadd.f32 %v87, %v529
    %v531 = vpop.f32.mrf.mxu0
    %v532 = vadd.f32 %v87, %v531
    %533 = vdwg.mxu0
    %534 = vst [vmem:[#allocation2] sm:$0xff] %v375
    %535 = vst [vmem:[#allocation2 + $0x8] sm:$0xff] %v377
    %536 = vst [vmem:[#allocation2 + $0x10] sm:$0xff] %v380
    %537 = vst [vmem:[#allocation2 + $0x18] sm:$0xff] %v382
    %538 = vst [vmem:[#allocation2 + $0x20] sm:$0xff] %v385
    %539 = vst [vmem:[#allocation2 + $0x28] sm:$0xff] %v387
    %540 = vst [vmem:[#allocation2 + $0x30] sm:$0xff] %v390
    %541 = vst [vmem:[#allocation2 + $0x38] sm:$0xff] %v392
    %542 = vst [vmem:[#allocation2 + $0x40] sm:$0xff] %v395
    %543 = vst [vmem:[#allocation2 + $0x48] sm:$0xff] %v397
    %544 = vst [vmem:[#allocation2 + $0x50] sm:$0xff] %v400
    %545 = vst [vmem:[#allocation2 + $0x58] sm:$0xff] %v402
    %546 = vst [vmem:[#allocation2 + $0x60] sm:$0xff] %v405
    %547 = vst [vmem:[#allocation2 + $0x68] sm:$0xff] %v407
    %548 = vst [vmem:[#allocation2 + $0x70] sm:$0xff] %v410
    %549 = vst [vmem:[#allocation2 + $0x78] sm:$0xff] %v412
    %550 = vst [vmem:[#allocation2 + $0x80] sm:$0xff] %v415
    %551 = vst [vmem:[#allocation2 + $0x88] sm:$0xff] %v417
    %552 = vst [vmem:[#allocation2 + $0x90] sm:$0xff] %v420
    %553 = vst [vmem:[#allocation2 + $0x98] sm:$0xff] %v422
    %554 = vst [vmem:[#allocation2 + $0xa0] sm:$0xff] %v425
    %555 = vst [vmem:[#allocation2 + $0xa8] sm:$0xff] %v427
    %556 = vst [vmem:[#allocation2 + $0xb0] sm:$0xff] %v430
    %557 = vst [vmem:[#allocation2 + $0xb8] sm:$0xff] %v432
    %558 = vst [vmem:[#allocation2 + $0xc0] sm:$0xff] %v435
    %559 = vst [vmem:[#allocation2 + $0xc8] sm:$0xff] %v437
    %560 = vst [vmem:[#allocation2 + $0xd0] sm:$0xff] %v440
    %561 = vst [vmem:[#allocation2 + $0xd8] sm:$0xff] %v442
    %562 = vst [vmem:[#allocation2 + $0xe0] sm:$0xff] %v445
    %563 = vst [vmem:[#allocation2 + $0xe8] sm:$0xff] %v447
    %564 = vst [vmem:[#allocation2 + $0xf0] sm:$0xff] %v450
    %565 = vst [vmem:[#allocation2 + $0xf8] sm:$0xff] %v452
    %566 = vst [vmem:[#allocation2 + $0x100] sm:$0xff] %v455
    %567 = vst [vmem:[#allocation2 + $0x108] sm:$0xff] %v457
    %568 = vst [vmem:[#allocation2 + $0x110] sm:$0xff] %v460
    %569 = vst [vmem:[#allocation2 + $0x118] sm:$0xff] %v462
    %570 = vst [vmem:[#allocation2 + $0x120] sm:$0xff] %v465
    %571 = vst [vmem:[#allocation2 + $0x128] sm:$0xff] %v467
    %572 = vst [vmem:[#allocation2 + $0x130] sm:$0xff] %v470
    %573 = vst [vmem:[#allocation2 + $0x138] sm:$0xff] %v472
    %574 = vst [vmem:[#allocation2 + $0x140] sm:$0xff] %v475
    %575 = vst [vmem:[#allocation2 + $0x148] sm:$0xff] %v477
    %576 = vst [vmem:[#allocation2 + $0x150] sm:$0xff] %v480
    %577 = vst [vmem:[#allocation2 + $0x158] sm:$0xff] %v482
    %578 = vst [vmem:[#allocation2 + $0x160] sm:$0xff] %v485
    %579 = vst [vmem:[#allocation2 + $0x168] sm:$0xff] %v487
    %580 = vst [vmem:[#allocation2 + $0x170] sm:$0xff] %v490
    %581 = vst [vmem:[#allocation2 + $0x178] sm:$0xff] %v492
    %582 = vst [vmem:[#allocation2 + $0x180] sm:$0xff] %v495
    %583 = vst [vmem:[#allocation2 + $0x188] sm:$0xff] %v497
    %584 = vst [vmem:[#allocation2 + $0x190] sm:$0xff] %v500
    %585 = vst [vmem:[#allocation2 + $0x198] sm:$0xff] %v502
    %586 = vst [vmem:[#allocation2 + $0x1a0] sm:$0xff] %v505
    %587 = vst [vmem:[#allocation2 + $0x1a8] sm:$0xff] %v507
    %588 = vst [vmem:[#allocation2 + $0x1b0] sm:$0xff] %v510
    %589 = vst [vmem:[#allocation2 + $0x1b8] sm:$0xff] %v512
    %590 = vst [vmem:[#allocation2 + $0x1c0] sm:$0xff] %v515
    %591 = vst [vmem:[#allocation2 + $0x1c8] sm:$0xff] %v517
    %592 = vst [vmem:[#allocation2 + $0x1d0] sm:$0xff] %v520
    %593 = vst [vmem:[#allocation2 + $0x1d8] sm:$0xff] %v522
    %594 = vst [vmem:[#allocation2 + $0x1e0] sm:$0xff] %v525
    %595 = vst [vmem:[#allocation2 + $0x1e8] sm:$0xff] %v527
    %596 = vst [vmem:[#allocation2 + $0x1f0] sm:$0xff] %v530
    %597 = vst [vmem:[#allocation2 + $0x1f8] sm:$0xff] %v532
    // Predicated region
    $region14: #{deformable_conv2d_forward.3} parent=1 // pred_check
      _
    $region15: #{deformable_conv2d_forward.3} parent=1 // pred_check_branch
      %599 = sbr.rel (0) target = $region17
    $region16: #{deformable_conv2d_forward.3} parent=1 // pred_region
      %601 = vsyncadd [#allocation3], 0
      %s602 = sshll.u32 [#allocation2], 4
      %s603 = int_to_ptr.vmem [resolvable:$true] %s602
      %s604 = sshll.u32 %s3, 4
      %s605 = int_to_ptr.hbm [resolvable:$true] %s604
      %610 = dma.vmem_to_hbm [thread:$0]  %s603, 8192, %s605, [#allocation3], 128, 128, 8
    $region17: #{deformable_conv2d_forward.3} parent=1 // pred_fallthru
      _
    // Predicated region
    $region18: #{deformable_conv2d_forward.3} parent=1 // pred_check
      _
    $region19: #{deformable_conv2d_forward.3} parent=1 // pred_check_branch
      %612 = sbr.rel (0) target = $region21
    $region20: #{deformable_conv2d_forward.3} parent=1 // pred_region
      %614 = dma.done [#allocation3], 8192
    $region21: #{deformable_conv2d_forward.3} parent=1 // pred_fallthru
      _
    %615 = vsyncpa [#allocation3], 1

</llo_original>
